<compile_context>
chip_gen: v7x
topology: tpu7x:2x2x1
jax: 0.10.0
libtpu: 0.0.40
codegen_flags: <defaults>
</compile_context>

<pallas_src>
import jax
import jax.numpy as jnp
import numpy as np
from jax import lax
from jax.experimental import pallas as pl
from jax.experimental.pallas import tpu as pltpu

LN_EPS = 1e-5


def _erf(x):
    # Abramowitz & Stegun 7.1.26 rational approximation (|err| <= 1.5e-7 with
    # an exact divide).  The divide is routed through the EUP approximate
    # reciprocal (otherwise-idle slot); its ~2^-12 relative error is absorbed
    # by the test tolerance below.
    ax = jnp.abs(x)
    t = pl.reciprocal(1.0 + 0.3275911 * ax, approx=True)
    poly = t * (0.254829592
                + t * (-0.284496736
                       + t * (1.421413741
                              + t * (-1.453152027
                                     + t * 1.061405429))))
    y = 1.0 - poly * jnp.exp(-ax * ax)
    return jnp.where(x < 0.0, -y, y)


def _gelu_exact(x):
    # torch nn.GELU() default (approximate='none'): 0.5*x*(1+erf(x/sqrt(2)))
    return 0.5 * x * (1.0 + _erf(x * 0.7071067811865476))


# ---------------------------------------------------------------------------
# Fused BiAttn kernel: single invocation, whole [B, N, C] tensor in VMEM.
# Assumes B*N is a multiple of 8 and C a multiple of 128 (true here);
# other sizes would need padding/masking.
# ---------------------------------------------------------------------------
def _biattn_kernel(x_ref, wpack_ref, cslab_ref, sslab_ref, o_ref):
    B, N, C = x_ref.shape
    rC = wpack_ref.shape[1] // 2

    x3 = x_ref[...]                                   # [B, N, C]  (ori_x)
    x = x3.reshape(B * N, C)

    # ---- unpack the two parameter slabs (static slices, no extra DMAs) ----
    ln_g = cslab_ref[0:1, :]                          # [1, C]
    ln_b = cslab_ref[1:2, :]                          # [1, C]
    bc = cslab_ref[2:3, :]                            # [1, C]
    wc = cslab_ref[8:8 + rC, :]                       # [rC, C] (sublane-aligned)
    b_pack = sslab_ref[0:1, :]                        # [1, 2rC] = [b_lr | b_gr]
    wsl = sslab_ref[1:2, :rC]                         # [1, rC]
    wsg = sslab_ref[1:2, rC:]                         # [1, rC]
    bs = sslab_ref[2:3, 0:1]                          # [1, 1]

    # ---- LayerNorm over channels (biased variance, eps inside rsqrt) ----
    mu = jnp.mean(x, axis=-1, keepdims=True)          # [B*N, 1]
    xc = x - mu
    var = jnp.mean(xc * xc, axis=-1, keepdims=True)
    xn = xc * lax.rsqrt(var + LN_EPS) * ln_g + ln_b   # [B*N, C]

    # ---- ONE MXU pass for both branches: [B*N, C] @ [C, 2rC] ----
    proj = jnp.dot(xn, wpack_ref[...],
                   preferred_element_type=jnp.float32) + b_pack   # [B*N, 2rC]

    l = _gelu_exact(proj[:, :rC])                     # [B*N, rC]  local branch
    # x_glob @ w_gr + b_gr == mean_N(xn @ w_gr + b_gr) by linearity.
    g = _gelu_exact(jnp.mean(proj[:, rC:].reshape(B, N, rC), axis=1))  # [B, rC]

    # ---- channel attention on VPU/XLU (broadcast-mul + sublane reduce) ----
    c_attn = jax.nn.sigmoid(
        jnp.sum(g[:, :, None] * wc[None, :, :], axis=1) + bc)     # [B, C]

    # ---- spatial attention: concat([l, g]) @ W_ss == l@wsl + g@wsg ----
    s_local = jnp.sum(l * wsl, axis=-1, keepdims=True).reshape(B, N, 1)
    s_glob = jnp.sum(g * wsg, axis=-1, keepdims=True)             # [B, 1]
    s_attn = jax.nn.sigmoid(s_local + s_glob[:, None, :] + bs)    # [B, N, 1]

    # ---- gate the ORIGINAL (pre-norm) tokens ----
    o_ref[...] = x3 * (c_attn[:, None, :] * s_attn)               # [B, N, C]


def _pack_params(params, C):
    """Pack 11 small torch-layout params into 3 lane/sublane-friendly slabs."""
    rC = params["w_gr"].shape[0]

    # Single matmul weight: [w_lr.T | w_gr.T]  -> [C, 2rC]
    w_pack = jnp.concatenate(
        [params["w_lr"].T, params["w_gr"].T], axis=1).astype(jnp.float32)

    # Channel slab [8 + rC, C]: ln_g / ln_b / b_cs in rows 0..2, w_cs.T at row 8.
    cslab = jnp.zeros((8 + rC, C), jnp.float32)
    cslab = cslab.at[0].set(params["ln_g"])
    cslab = cslab.at[1].set(params["ln_b"])
    cslab = cslab.at[2].set(params["b_cs"])
    cslab = cslab.at[8:].set(params["w_cs"].T)        # [rC, C]

    # Small slab [3, 2rC]: row0 = [b_lr | b_gr], row1 = [wsl | wsg], row2[0] = b_ss.
    sslab = jnp.zeros((3, 2 * rC), jnp.float32)
    sslab = sslab.at[0, :rC].set(params["b_lr"])
    sslab = sslab.at[0, rC:].set(params["b_gr"])
    sslab = sslab.at[1, :].set(params["w_ss"][0])
    sslab = sslab.at[2, 0].set(params["b_ss"][0])
    return w_pack, cslab, sslab


@jax.jit
def biattn_forward(x, params):
    """x: [B, N, C] float32; params in torch layout ([out, in] Linear weights)."""
    B, N, C = x.shape
    w_pack, cslab, sslab = _pack_params(params, C)

    vmem = pl.BlockSpec(memory_space=pltpu.MemorySpace.VMEM)
    return pl.pallas_call(
        _biattn_kernel,
        out_shape=jax.ShapeDtypeStruct((B, N, C), jnp.float32),
        in_specs=[vmem, vmem, vmem, vmem],
        out_specs=vmem,
    )(x, w_pack, cslab, sslab)


# ---------------------------------------------------------------------------
# Pure-JAX reference (mirrors the PyTorch forward exactly, incl. the concat)
# ---------------------------------------------------------------------------
def reference_forward(x, p):
    mu = x.mean(-1, keepdims=True)
    var = ((x - mu) ** 2).mean(-1, keepdims=True)
    xn = (x - mu) / jnp.sqrt(var + LN_EPS) * p["ln_g"] + p["ln_b"]

    x_global = xn.mean(1, keepdims=True)                               # [B,1,C]
    g = jax.nn.gelu(x_global @ p["w_gr"].T + p["b_gr"], approximate=False)
    l = jax.nn.gelu(xn @ p["w_lr"].T + p["b_lr"], approximate=False)
    c_attn = jax.nn.sigmoid(g @ p["w_cs"].T + p["b_cs"])               # [B,1,C]
    s_in = jnp.concatenate([l, jnp.broadcast_to(g, l.shape)], axis=-1)
    s_attn = jax.nn.sigmoid(s_in @ p["w_ss"].T + p["b_ss"])            # [B,N,1]
    return x * (c_attn * s_attn)


if __name__ == "__main__":
    # BiAttn(in_channels=128), act_ratio=0.125 -> reduce_channels=16
    B, N, C = 2, 64, 128
    rC = int(C * 0.125)

    key = jax.random.PRNGKey(0)
    ks = jax.random.split(key, 11)
    params = {
        "ln_g": 1.0 + 0.1 * jax.random.normal(ks[0], (C,), jnp.float32),
        "ln_b": 0.1 * jax.random.normal(ks[1], (C,), jnp.float32),
        # nn.Linear weights are [out_features, in_features]
        "w_gr": 0.1 * jax.random.normal(ks[2], (rC, C), jnp.float32),
        "b_gr": 0.1 * jax.random.normal(ks[3], (rC,), jnp.float32),
        "w_lr": 0.1 * jax.random.normal(ks[4], (rC, C), jnp.float32),
        "b_lr": 0.1 * jax.random.normal(ks[5], (rC,), jnp.float32),
        "w_cs": 0.1 * jax.random.normal(ks[6], (C, rC), jnp.float32),
        "b_cs": 0.1 * jax.random.normal(ks[7], (C,), jnp.float32),
        "w_ss": 0.1 * jax.random.normal(ks[8], (1, 2 * rC), jnp.float32),
        "b_ss": 0.1 * jax.random.normal(ks[9], (1,), jnp.float32),
    }
    x = jax.random.normal(ks[10], (B, N, C), jnp.float32)

    out = jax.block_until_ready(biattn_forward(x, params))
    assert out.shape == (B, N, C), out.shape

    ref = jax.block_until_ready(reference_forward(x, params))
    # Tolerance covers the A&S erf polynomial (<=1.5e-7) plus the EUP
    # approximate-reciprocal inside it (~2^-12 rel); any structural error
    # would be orders of magnitude larger than this.
    np.testing.assert_allclose(np.asarray(out), np.asarray(ref),
                               rtol=1e-3, atol=2e-4)

    print("KERNEL_OK")
</pallas_src>

<mosaic_0001>
module attributes {stable_mosaic.version = 11 : i64} {
  func.func @_biattn_kernel(%arg0: memref<2x64x128xf32, #tpu.memory_space<vmem>>, %arg1: memref<128x32xf32, #tpu.memory_space<vmem>>, %arg2: memref<24x128xf32, #tpu.memory_space<vmem>>, %arg3: memref<3x32xf32, #tpu.memory_space<vmem>>, %arg4: memref<2x64x128xf32, #tpu.memory_space<vmem>>) attributes {dimension_semantics = [], scalar_prefetch = 0 : i64, scratch_operands = 0 : i64, tpu.core_type = #tpu.core_type<tc>} {
    %c0 = arith.constant 0 : index
    %c0_0 = arith.constant 0 : index
    %c0_1 = arith.constant 0 : index
    %0 = vector.load %arg0[%c0, %c0_0, %c0_1] : memref<2x64x128xf32, #tpu.memory_space<vmem>>, vector<2x64x128xf32>
    %1 = vector.shape_cast %0 : vector<2x64x128xf32> to vector<128x128xf32>
    %c0_2 = arith.constant 0 : index
    %c0_3 = arith.constant 0 : index
    %2 = vector.load %arg2[%c0_2, %c0_3] : memref<24x128xf32, #tpu.memory_space<vmem>>, vector<1x128xf32>
    %c1 = arith.constant 1 : index
    %c0_4 = arith.constant 0 : index
    %3 = vector.load %arg2[%c1, %c0_4] : memref<24x128xf32, #tpu.memory_space<vmem>>, vector<1x128xf32>
    %c2 = arith.constant 2 : index
    %c0_5 = arith.constant 0 : index
    %4 = vector.load %arg2[%c2, %c0_5] : memref<24x128xf32, #tpu.memory_space<vmem>>, vector<1x128xf32>
    %c8 = arith.constant 8 : index
    %c0_6 = arith.constant 0 : index
    %5 = vector.load %arg2[%c8, %c0_6] : memref<24x128xf32, #tpu.memory_space<vmem>>, vector<16x128xf32>
    %c0_7 = arith.constant 0 : index
    %c0_8 = arith.constant 0 : index
    %6 = vector.load %arg3[%c0_7, %c0_8] : memref<3x32xf32, #tpu.memory_space<vmem>>, vector<1x32xf32>
    %c1_9 = arith.constant 1 : index
    %c0_10 = arith.constant 0 : index
    %7 = vector.load %arg3[%c1_9, %c0_10] : memref<3x32xf32, #tpu.memory_space<vmem>>, vector<1x16xf32>
    %c1_11 = arith.constant 1 : index
    %c16 = arith.constant 16 : index
    %8 = vector.load %arg3[%c1_11, %c16] : memref<3x32xf32, #tpu.memory_space<vmem>>, vector<1x16xf32>
    %c2_12 = arith.constant 2 : index
    %c0_13 = arith.constant 0 : index
    %9 = vector.load %arg3[%c2_12, %c0_13] : memref<3x32xf32, #tpu.memory_space<vmem>>, vector<1x1xf32>
    %cst = arith.constant dense<0.000000e+00> : vector<128xf32>
    %10 = vector.multi_reduction <add>, %1, %cst [1] : vector<128x128xf32> to vector<128xf32>
    %11 = vector.shape_cast %10 : vector<128xf32> to vector<128x1xf32>
    %cst_14 = arith.constant 1.280000e+02 : f32
    %12 = vector.broadcast %cst_14 : f32 to vector<128x1xf32>
    %13 = arith.divf %11, %12 : vector<128x1xf32>
    %14 = vector.broadcast %13 : vector<128x1xf32> to vector<128x128xf32>
    %15 = arith.subf %1, %14 : vector<128x128xf32>
    %16 = arith.mulf %15, %15 : vector<128x128xf32>
    %cst_15 = arith.constant dense<0.000000e+00> : vector<128xf32>
    %17 = vector.multi_reduction <add>, %16, %cst_15 [1] : vector<128x128xf32> to vector<128xf32>
    %18 = vector.shape_cast %17 : vector<128xf32> to vector<128x1xf32>
    %cst_16 = arith.constant 1.280000e+02 : f32
    %19 = vector.broadcast %cst_16 : f32 to vector<128x1xf32>
    %20 = arith.divf %18, %19 : vector<128x1xf32>
    %cst_17 = arith.constant 9.99999974E-6 : f32
    %21 = vector.broadcast %cst_17 : f32 to vector<128x1xf32>
    %22 = arith.addf %20, %21 : vector<128x1xf32>
    %23 = math.rsqrt %22 : vector<128x1xf32>
    %24 = vector.broadcast %23 : vector<128x1xf32> to vector<128x128xf32>
    %25 = arith.mulf %15, %24 : vector<128x128xf32>
    %26 = vector.broadcast %2 : vector<1x128xf32> to vector<128x128xf32>
    %27 = arith.mulf %25, %26 : vector<128x128xf32>
    %28 = vector.broadcast %3 : vector<1x128xf32> to vector<128x128xf32>
    %29 = arith.addf %27, %28 : vector<128x128xf32>
    %c0_18 = arith.constant 0 : index
    %c0_19 = arith.constant 0 : index
    %30 = vector.load %arg1[%c0_18, %c0_19] : memref<128x32xf32, #tpu.memory_space<vmem>>, vector<128x32xf32>
    %cst_20 = arith.constant dense<0.000000e+00> : vector<128x32xf32>
    %31 = tpu.matmul %29, %30, %cst_20 {dimension_numbers = #tpu.dot_dimension_numbers<[1], [0], [0], [1], [0, 0, 1, 1], [], []>} : vector<128x128xf32>, vector<128x32xf32>, vector<128x32xf32> -> vector<128x32xf32>
    %32 = vector.broadcast %6 : vector<1x32xf32> to vector<128x32xf32>
    %33 = arith.addf %31, %32 : vector<128x32xf32>
    %34 = vector.extract_strided_slice %33 {offsets = [0, 0], sizes = [128, 16], strides = [1, 1]} : vector<128x32xf32> to vector<128x16xf32>
    %cst_21 = arith.constant 5.000000e-01 : f32
    %35 = vector.broadcast %cst_21 : f32 to vector<128x16xf32>
    %36 = arith.mulf %35, %34 : vector<128x16xf32>
    %cst_22 = arith.constant 0.707106769 : f32
    %37 = vector.broadcast %cst_22 : f32 to vector<128x16xf32>
    %38 = arith.mulf %34, %37 : vector<128x16xf32>
    %39 = math.absf %38 : vector<128x16xf32>
    %cst_23 = arith.constant 0.327591091 : f32
    %40 = vector.broadcast %cst_23 : f32 to vector<128x16xf32>
    %41 = arith.mulf %40, %39 : vector<128x16xf32>
    %cst_24 = arith.constant 1.000000e+00 : f32
    %42 = vector.broadcast %cst_24 : f32 to vector<128x16xf32>
    %43 = arith.addf %42, %41 : vector<128x16xf32>
    %44 = tpu.reciprocal %43 {approx = true} : vector<128x16xf32> -> vector<128x16xf32>
    %cst_25 = arith.constant 1.06140542 : f32
    %45 = vector.broadcast %cst_25 : f32 to vector<128x16xf32>
    %46 = arith.mulf %44, %45 : vector<128x16xf32>
    %cst_26 = arith.constant -1.45315206 : f32
    %47 = vector.broadcast %cst_26 : f32 to vector<128x16xf32>
    %48 = arith.addf %47, %46 : vector<128x16xf32>
    %49 = arith.mulf %44, %48 : vector<128x16xf32>
    %cst_27 = arith.constant 1.42141378 : f32
    %50 = vector.broadcast %cst_27 : f32 to vector<128x16xf32>
    %51 = arith.addf %50, %49 : vector<128x16xf32>
    %52 = arith.mulf %44, %51 : vector<128x16xf32>
    %cst_28 = arith.constant -0.284496725 : f32
    %53 = vector.broadcast %cst_28 : f32 to vector<128x16xf32>
    %54 = arith.addf %53, %52 : vector<128x16xf32>
    %55 = arith.mulf %44, %54 : vector<128x16xf32>
    %cst_29 = arith.constant 0.254829586 : f32
    %56 = vector.broadcast %cst_29 : f32 to vector<128x16xf32>
    %57 = arith.addf %56, %55 : vector<128x16xf32>
    %58 = arith.mulf %44, %57 : vector<128x16xf32>
    %cst_30 = arith.constant 0.000000e+00 : f32
    %59 = vector.broadcast %cst_30 : f32 to vector<128x16xf32>
    %60 = arith.subf %59, %39 : vector<128x16xf32>
    %61 = arith.mulf %60, %39 : vector<128x16xf32>
    %62 = math.exp %61 : vector<128x16xf32>
    %63 = arith.mulf %58, %62 : vector<128x16xf32>
    %cst_31 = arith.constant 1.000000e+00 : f32
    %64 = vector.broadcast %cst_31 : f32 to vector<128x16xf32>
    %65 = arith.subf %64, %63 : vector<128x16xf32>
    %cst_32 = arith.constant 0.000000e+00 : f32
    %66 = vector.broadcast %cst_32 : f32 to vector<128x16xf32>
    %67 = arith.cmpf olt, %38, %66 : vector<128x16xf32>
    %cst_33 = arith.constant 0.000000e+00 : f32
    %68 = vector.broadcast %cst_33 : f32 to vector<128x16xf32>
    %69 = arith.subf %68, %65 : vector<128x16xf32>
    %70 = arith.select %67, %69, %65 : vector<128x16xi1>, vector<128x16xf32>
    %cst_34 = arith.constant 1.000000e+00 : f32
    %71 = vector.broadcast %cst_34 : f32 to vector<128x16xf32>
    %72 = arith.addf %71, %70 : vector<128x16xf32>
    %73 = arith.mulf %36, %72 : vector<128x16xf32>
    %74 = vector.extract_strided_slice %33 {offsets = [0, 16], sizes = [128, 16], strides = [1, 1]} : vector<128x32xf32> to vector<128x16xf32>
    %75 = vector.shape_cast %74 : vector<128x16xf32> to vector<2x64x16xf32>
    %cst_35 = arith.constant dense<0.000000e+00> : vector<2x16xf32>
    %76 = vector.multi_reduction <add>, %75, %cst_35 [1] : vector<2x64x16xf32> to vector<2x16xf32>
    %cst_36 = arith.constant 6.400000e+01 : f32
    %77 = vector.broadcast %cst_36 : f32 to vector<2x16xf32>
    %78 = arith.divf %76, %77 : vector<2x16xf32>
    %cst_37 = arith.constant 5.000000e-01 : f32
    %79 = vector.broadcast %cst_37 : f32 to vector<2x16xf32>
    %80 = arith.mulf %79, %78 : vector<2x16xf32>
    %cst_38 = arith.constant 0.707106769 : f32
    %81 = vector.broadcast %cst_38 : f32 to vector<2x16xf32>
    %82 = arith.mulf %78, %81 : vector<2x16xf32>
    %83 = math.absf %82 : vector<2x16xf32>
    %cst_39 = arith.constant 0.327591091 : f32
    %84 = vector.broadcast %cst_39 : f32 to vector<2x16xf32>
    %85 = arith.mulf %84, %83 : vector<2x16xf32>
    %cst_40 = arith.constant 1.000000e+00 : f32
    %86 = vector.broadcast %cst_40 : f32 to vector<2x16xf32>
    %87 = arith.addf %86, %85 : vector<2x16xf32>
    %88 = tpu.reciprocal %87 {approx = true} : vector<2x16xf32> -> vector<2x16xf32>
    %cst_41 = arith.constant 1.06140542 : f32
    %89 = vector.broadcast %cst_41 : f32 to vector<2x16xf32>
    %90 = arith.mulf %88, %89 : vector<2x16xf32>
    %cst_42 = arith.constant -1.45315206 : f32
    %91 = vector.broadcast %cst_42 : f32 to vector<2x16xf32>
    %92 = arith.addf %91, %90 : vector<2x16xf32>
    %93 = arith.mulf %88, %92 : vector<2x16xf32>
    %cst_43 = arith.constant 1.42141378 : f32
    %94 = vector.broadcast %cst_43 : f32 to vector<2x16xf32>
    %95 = arith.addf %94, %93 : vector<2x16xf32>
    %96 = arith.mulf %88, %95 : vector<2x16xf32>
    %cst_44 = arith.constant -0.284496725 : f32
    %97 = vector.broadcast %cst_44 : f32 to vector<2x16xf32>
    %98 = arith.addf %97, %96 : vector<2x16xf32>
    %99 = arith.mulf %88, %98 : vector<2x16xf32>
    %cst_45 = arith.constant 0.254829586 : f32
    %100 = vector.broadcast %cst_45 : f32 to vector<2x16xf32>
    %101 = arith.addf %100, %99 : vector<2x16xf32>
    %102 = arith.mulf %88, %101 : vector<2x16xf32>
    %cst_46 = arith.constant 0.000000e+00 : f32
    %103 = vector.broadcast %cst_46 : f32 to vector<2x16xf32>
    %104 = arith.subf %103, %83 : vector<2x16xf32>
    %105 = arith.mulf %104, %83 : vector<2x16xf32>
    %106 = math.exp %105 : vector<2x16xf32>
    %107 = arith.mulf %102, %106 : vector<2x16xf32>
    %cst_47 = arith.constant 1.000000e+00 : f32
    %108 = vector.broadcast %cst_47 : f32 to vector<2x16xf32>
    %109 = arith.subf %108, %107 : vector<2x16xf32>
    %cst_48 = arith.constant 0.000000e+00 : f32
    %110 = vector.broadcast %cst_48 : f32 to vector<2x16xf32>
    %111 = arith.cmpf olt, %82, %110 : vector<2x16xf32>
    %cst_49 = arith.constant 0.000000e+00 : f32
    %112 = vector.broadcast %cst_49 : f32 to vector<2x16xf32>
    %113 = arith.subf %112, %109 : vector<2x16xf32>
    %114 = arith.select %111, %113, %109 : vector<2x16xi1>, vector<2x16xf32>
    %cst_50 = arith.constant 1.000000e+00 : f32
    %115 = vector.broadcast %cst_50 : f32 to vector<2x16xf32>
    %116 = arith.addf %115, %114 : vector<2x16xf32>
    %117 = arith.mulf %80, %116 : vector<2x16xf32>
    %118 = vector.shape_cast %117 : vector<2x16xf32> to vector<2x16x1xf32>
    %119 = vector.shape_cast %5 : vector<16x128xf32> to vector<1x16x128xf32>
    %120 = vector.broadcast %118 : vector<2x16x1xf32> to vector<2x16x128xf32>
    %121 = vector.broadcast %119 : vector<1x16x128xf32> to vector<2x16x128xf32>
    %122 = arith.mulf %120, %121 : vector<2x16x128xf32>
    %cst_51 = arith.constant dense<0.000000e+00> : vector<2x128xf32>
    %123 = vector.multi_reduction <add>, %122, %cst_51 [1] : vector<2x16x128xf32> to vector<2x128xf32>
    %124 = vector.broadcast %4 : vector<1x128xf32> to vector<2x128xf32>
    %125 = arith.addf %123, %124 : vector<2x128xf32>
    %126 = arith.negf %125 : vector<2x128xf32>
    %127 = math.exp %126 : vector<2x128xf32>
    %cst_52 = arith.constant 1.000000e+00 : f32
    %128 = vector.broadcast %cst_52 : f32 to vector<2x128xf32>
    %129 = arith.addf %128, %127 : vector<2x128xf32>
    %130 = arith.divf %128, %129 : vector<2x128xf32>
    %131 = vector.broadcast %7 : vector<1x16xf32> to vector<128x16xf32>
    %132 = arith.mulf %73, %131 : vector<128x16xf32>
    %cst_53 = arith.constant dense<0.000000e+00> : vector<128xf32>
    %133 = vector.multi_reduction <add>, %132, %cst_53 [1] : vector<128x16xf32> to vector<128xf32>
    %134 = vector.shape_cast %133 : vector<128xf32> to vector<128x1xf32>
    %135 = vector.shape_cast %134 : vector<128x1xf32> to vector<2x64x1xf32>
    %136 = vector.broadcast %8 : vector<1x16xf32> to vector<2x16xf32>
    %137 = arith.mulf %117, %136 : vector<2x16xf32>
    %cst_54 = arith.constant dense<0.000000e+00> : vector<2xf32>
    %138 = vector.multi_reduction <add>, %137, %cst_54 [1] : vector<2x16xf32> to vector<2xf32>
    %139 = vector.shape_cast %138 : vector<2xf32> to vector<2x1xf32>
    %140 = vector.shape_cast %139 : vector<2x1xf32> to vector<2x1x1xf32>
    %141 = vector.broadcast %140 : vector<2x1x1xf32> to vector<2x64x1xf32>
    %142 = arith.addf %135, %141 : vector<2x64x1xf32>
    %143 = vector.shape_cast %9 : vector<1x1xf32> to vector<1x1x1xf32>
    %144 = vector.broadcast %143 : vector<1x1x1xf32> to vector<2x64x1xf32>
    %145 = arith.addf %142, %144 : vector<2x64x1xf32>
    %146 = arith.negf %145 : vector<2x64x1xf32>
    %147 = math.exp %146 : vector<2x64x1xf32>
    %cst_55 = arith.constant 1.000000e+00 : f32
    %148 = vector.broadcast %cst_55 : f32 to vector<2x64x1xf32>
    %149 = arith.addf %148, %147 : vector<2x64x1xf32>
    %150 = arith.divf %148, %149 : vector<2x64x1xf32>
    %151 = vector.shape_cast %130 : vector<2x128xf32> to vector<2x1x128xf32>
    %152 = vector.broadcast %151 : vector<2x1x128xf32> to vector<2x64x128xf32>
    %153 = vector.broadcast %150 : vector<2x64x1xf32> to vector<2x64x128xf32>
    %154 = arith.mulf %152, %153 : vector<2x64x128xf32>
    %155 = arith.mulf %0, %154 : vector<2x64x128xf32>
    %c0_56 = arith.constant 0 : index
    %c0_57 = arith.constant 0 : index
    %c0_58 = arith.constant 0 : index
    %156 = vector.load %arg4[%c0_56, %c0_57, %c0_58] : memref<2x64x128xf32, #tpu.memory_space<vmem>>, vector<2x64x128xf32>
    tpu.vector_store %arg4[%c0_56, %c0_57, %c0_58], %155 {strides = array<i32>} : memref<2x64x128xf32, #tpu.memory_space<vmem>>, vector<2x64x128xf32>,
    return
  }
}

</mosaic_0001>

<llo_original>
// kernel: biattn_forward.1
$region0: #{biattn_forward.1}
  #allocation0 [shape = 'u32[]', space=smem, size = 0x4, offset = 0x4, fixed_abs, tag = 'smem constant byte address 0x4 - core index']
  #allocation1 [shape = 'u32[144,128]{1,0:T(1,128)}', space=vmem, size = 0x12000, scoped, tag = 'internal scratch']
  %s0 = inlined_call_operand.vmem [shape: f32[2,64,128], index: 0, kind: input, shape index: {}]
  %s1 = inlined_call_operand.vmem [shape: f32[128,32], index: 1, kind: input, shape index: {}]
  %s2 = inlined_call_operand.vmem [shape: f32[24,128], index: 2, kind: input, shape index: {}]
  %s3 = inlined_call_operand.vmem [shape: f32[3,32], index: 3, kind: input, shape index: {}]
  %s4 = inlined_call_operand.hbm [shape: f32[2,64,128], index: 4, kind: output, shape index: {}]
  %s5 = sld [smem:[#allocation0]]
  $region26: #{biattn_forward.1} parent=0
    _
  %s7 = ssub.s32 1, %s5
  %s8 = scalar_select 0, %s7, %s5
  $region1: #{biattn_forward.1} parent=0
    #allocation2 [shape = 'u8[65536]{0}', space=vmem, size = 0x10000, scoped, tag = 'output window, operand 0, single buffered']
    #allocation3 [shape = 's32[1]{0}', space=sflag, size = 0x4, scoped, tag = 'scoped memory for biattn_forward.1']
    %9 = vsyncpa [#allocation3], 0
    // Predicated region
    $region2: #{biattn_forward.1} parent=1 // pred_check
      _
    $region3: #{biattn_forward.1} parent=1 // pred_check_branch
      %11 = sbr.rel (0) target = $region5
    $region4: #{biattn_forward.1} parent=1 // pred_region
      _
    $region5: #{biattn_forward.1} parent=1 // pred_fallthru
      _
    // Predicated region
    $region6: #{biattn_forward.1} parent=1 // pred_check
      _
    $region7: #{biattn_forward.1} parent=1 // pred_check_branch
      %13 = sbr.rel (0) target = $region9
    $region8: #{biattn_forward.1} parent=1 // pred_region
      _
    $region9: #{biattn_forward.1} parent=1 // pred_fallthru
      _
    // Predicated region
    $region10: #{biattn_forward.1} parent=1 // pred_check
      _
    $region11: #{biattn_forward.1} parent=1 // pred_check_branch
      %15 = sbr.rel (0) target = $region13
    $region12: #{biattn_forward.1} parent=1 // pred_region
      _
    $region13: #{biattn_forward.1} parent=1 // pred_fallthru
      _
    // Predicated region
    $region14: #{biattn_forward.1} parent=1 // pred_check
      _
    $region15: #{biattn_forward.1} parent=1 // pred_check_branch
      %17 = sbr.rel (0) target = $region17
    $region16: #{biattn_forward.1} parent=1 // pred_region
      _
    $region17: #{biattn_forward.1} parent=1 // pred_fallthru
      _
    %v18 = vld [vmem:[%s0] sm:$0xff]
    %v19 = vld [vmem:[%s0 + $0x8] sm:$0xff]
    %v20 = vld [vmem:[%s0 + $0x10] sm:$0xff]
    %v21 = vld [vmem:[%s0 + $0x18] sm:$0xff]
    %v22 = vld [vmem:[%s0 + $0x20] sm:$0xff]
    %v23 = vld [vmem:[%s0 + $0x28] sm:$0xff]
    %v24 = vld [vmem:[%s0 + $0x30] sm:$0xff]
    %v25 = vld [vmem:[%s0 + $0x38] sm:$0xff]
    %v26 = vld [vmem:[%s0 + $0x40] sm:$0xff]
    %v27 = vld [vmem:[%s0 + $0x48] sm:$0xff]
    %v28 = vld [vmem:[%s0 + $0x50] sm:$0xff]
    %v29 = vld [vmem:[%s0 + $0x58] sm:$0xff]
    %v30 = vld [vmem:[%s0 + $0x60] sm:$0xff]
    %v31 = vld [vmem:[%s0 + $0x68] sm:$0xff]
    %v32 = vld [vmem:[%s0 + $0x70] sm:$0xff]
    %v33 = vld [vmem:[%s0 + $0x78] sm:$0xff]
    %v34 = vld [vmem:[%s2] sm:$0x1]
    %v35 = vld [vmem:[%s2 + $0x1] sm:$0x1]
    %v36 = vld [vmem:[%s2 + $0x2] sm:$0x1]
    %v37 = vld [vmem:[%s2 + $0x8] sm:$0xff]
    %v38 = vld [vmem:[%s2 + $0x10] sm:$0xff]
    %v39 = vld [vmem:[%s3] sm:$0x1]
    %v40 = vld [vmem:[%s3 + $0x1] sm:$0x1]
    %v41 = vld [vmem:[%s3 + $0x2] sm:$0x1]
    %42 = vadd.xlane.f32.xlu0 %v18
    %v43 = vpop.xlane.xlu0 %42
    %44 = vadd.xlane.f32.xlu0 %v19
    %v45 = vpop.xlane.xlu0 %44
    %46 = vadd.xlane.f32.xlu0 %v20
    %v47 = vpop.xlane.xlu0 %46
    %48 = vadd.xlane.f32.xlu0 %v21
    %v49 = vpop.xlane.xlu0 %48
    %50 = vadd.xlane.f32.xlu0 %v22
    %v51 = vpop.xlane.xlu0 %50
    %52 = vadd.xlane.f32.xlu0 %v23
    %v53 = vpop.xlane.xlu0 %52
    %54 = vadd.xlane.f32.xlu0 %v24
    %v55 = vpop.xlane.xlu0 %54
    %56 = vadd.xlane.f32.xlu0 %v25
    %v57 = vpop.xlane.xlu0 %56
    %58 = vadd.xlane.f32.xlu0 %v26
    %v59 = vpop.xlane.xlu0 %58
    %60 = vadd.xlane.f32.xlu0 %v27
    %v61 = vpop.xlane.xlu0 %60
    %62 = vadd.xlane.f32.xlu0 %v28
    %v63 = vpop.xlane.xlu0 %62
    %64 = vadd.xlane.f32.xlu0 %v29
    %v65 = vpop.xlane.xlu0 %64
    %66 = vadd.xlane.f32.xlu0 %v30
    %v67 = vpop.xlane.xlu0 %66
    %68 = vadd.xlane.f32.xlu0 %v31
    %v69 = vpop.xlane.xlu0 %68
    %70 = vadd.xlane.f32.xlu0 %v32
    %v71 = vpop.xlane.xlu0 %70
    %72 = vadd.xlane.f32.xlu0 %v33
    %v73 = vpop.xlane.xlu0 %72
    %v74 = vrcp.pop 128.0
    %v75 = vmul.f32 %v43, %v74
    %v76 = vmul.f32 %v45, %v74
    %v77 = vmul.f32 %v47, %v74
    %v78 = vmul.f32 %v49, %v74
    %v79 = vmul.f32 %v51, %v74
    %v80 = vmul.f32 %v53, %v74
    %v81 = vmul.f32 %v55, %v74
    %v82 = vmul.f32 %v57, %v74
    %v83 = vmul.f32 %v59, %v74
    %v84 = vmul.f32 %v61, %v74
    %v85 = vmul.f32 %v63, %v74
    %v86 = vmul.f32 %v65, %v74
    %v87 = vmul.f32 %v67, %v74
    %v88 = vmul.f32 %v69, %v74
    %v89 = vmul.f32 %v71, %v74
    %v90 = vmul.f32 %v73, %v74
    %v91 = vsub.f32 %v18, %v75
    %v92 = vsub.f32 %v19, %v76
    %v93 = vsub.f32 %v20, %v77
    %v94 = vsub.f32 %v21, %v78
    %v95 = vsub.f32 %v22, %v79
    %v96 = vsub.f32 %v23, %v80
    %v97 = vsub.f32 %v24, %v81
    %v98 = vsub.f32 %v25, %v82
    %v99 = vsub.f32 %v26, %v83
    %v100 = vsub.f32 %v27, %v84
    %v101 = vsub.f32 %v28, %v85
    %v102 = vsub.f32 %v29, %v86
    %v103 = vsub.f32 %v30, %v87
    %v104 = vsub.f32 %v31, %v88
    %v105 = vsub.f32 %v32, %v89
    %v106 = vsub.f32 %v33, %v90
    %v107 = vmul.f32 %v91, %v91
    %v108 = vmul.f32 %v92, %v92
    %v109 = vmul.f32 %v93, %v93
    %v110 = vmul.f32 %v94, %v94
    %v111 = vmul.f32 %v95, %v95
    %v112 = vmul.f32 %v96, %v96
    %v113 = vmul.f32 %v97, %v97
    %v114 = vmul.f32 %v98, %v98
    %v115 = vmul.f32 %v99, %v99
    %v116 = vmul.f32 %v100, %v100
    %v117 = vmul.f32 %v101, %v101
    %v118 = vmul.f32 %v102, %v102
    %v119 = vmul.f32 %v103, %v103
    %v120 = vmul.f32 %v104, %v104
    %v121 = vmul.f32 %v105, %v105
    %v122 = vmul.f32 %v106, %v106
    %123 = vadd.xlane.f32.xlu0 %v107
    %v124 = vpop.xlane.xlu0 %123
    %125 = vadd.xlane.f32.xlu0 %v108
    %v126 = vpop.xlane.xlu0 %125
    %127 = vadd.xlane.f32.xlu0 %v109
    %v128 = vpop.xlane.xlu0 %127
    %129 = vadd.xlane.f32.xlu0 %v110
    %v130 = vpop.xlane.xlu0 %129
    %131 = vadd.xlane.f32.xlu0 %v111
    %v132 = vpop.xlane.xlu0 %131
    %133 = vadd.xlane.f32.xlu0 %v112
    %v134 = vpop.xlane.xlu0 %133
    %135 = vadd.xlane.f32.xlu0 %v113
    %v136 = vpop.xlane.xlu0 %135
    %137 = vadd.xlane.f32.xlu0 %v114
    %v138 = vpop.xlane.xlu0 %137
    %139 = vadd.xlane.f32.xlu0 %v115
    %v140 = vpop.xlane.xlu0 %139
    %141 = vadd.xlane.f32.xlu0 %v116
    %v142 = vpop.xlane.xlu0 %141
    %143 = vadd.xlane.f32.xlu0 %v117
    %v144 = vpop.xlane.xlu0 %143
    %145 = vadd.xlane.f32.xlu0 %v118
    %v146 = vpop.xlane.xlu0 %145
    %147 = vadd.xlane.f32.xlu0 %v119
    %v148 = vpop.xlane.xlu0 %147
    %149 = vadd.xlane.f32.xlu0 %v120
    %v150 = vpop.xlane.xlu0 %149
    %151 = vadd.xlane.f32.xlu0 %v121
    %v152 = vpop.xlane.xlu0 %151
    %153 = vadd.xlane.f32.xlu0 %v122
    %v154 = vpop.xlane.xlu0 %153
    %v155 = vmul.f32 %v124, %v74
    %v156 = vmul.f32 %v126, %v74
    %v157 = vmul.f32 %v128, %v74
    %v158 = vmul.f32 %v130, %v74
    %v159 = vmul.f32 %v132, %v74
    %v160 = vmul.f32 %v134, %v74
    %v161 = vmul.f32 %v136, %v74
    %v162 = vmul.f32 %v138, %v74
    %v163 = vmul.f32 %v140, %v74
    %v164 = vmul.f32 %v142, %v74
    %v165 = vmul.f32 %v144, %v74
    %v166 = vmul.f32 %v146, %v74
    %v167 = vmul.f32 %v148, %v74
    %v168 = vmul.f32 %v150, %v74
    %v169 = vmul.f32 %v152, %v74
    %v170 = vmul.f32 %v154, %v74
    %v171 = vadd.f32 %v155, 1e-05
    %v172 = vadd.f32 %v156, 1e-05
    %v173 = vadd.f32 %v157, 1e-05
    %v174 = vadd.f32 %v158, 1e-05
    %v175 = vadd.f32 %v159, 1e-05
    %v176 = vadd.f32 %v160, 1e-05
    %v177 = vadd.f32 %v161, 1e-05
    %v178 = vadd.f32 %v162, 1e-05
    %v179 = vadd.f32 %v163, 1e-05
    %v180 = vadd.f32 %v164, 1e-05
    %v181 = vadd.f32 %v165, 1e-05
    %v182 = vadd.f32 %v166, 1e-05
    %v183 = vadd.f32 %v167, 1e-05
    %v184 = vadd.f32 %v168, 1e-05
    %v185 = vadd.f32 %v169, 1e-05
    %v186 = vadd.f32 %v170, 1e-05
    %v187 = vrsqrt.pop %v171
    %v188 = vrsqrt.pop %v172
    %v189 = vrsqrt.pop %v173
    %v190 = vrsqrt.pop %v174
    %v191 = vrsqrt.pop %v175
    %v192 = vrsqrt.pop %v176
    %v193 = vrsqrt.pop %v177
    %v194 = vrsqrt.pop %v178
    %v195 = vrsqrt.pop %v179
    %v196 = vrsqrt.pop %v180
    %v197 = vrsqrt.pop %v181
    %v198 = vrsqrt.pop %v182
    %v199 = vrsqrt.pop %v183
    %v200 = vrsqrt.pop %v184
    %v201 = vrsqrt.pop %v185
    %v202 = vrsqrt.pop %v186
    %v203 = vmul.f32 %v91, %v187
    %v204 = vmul.f32 %v92, %v188
    %v205 = vmul.f32 %v93, %v189
    %v206 = vmul.f32 %v94, %v190
    %v207 = vmul.f32 %v95, %v191
    %v208 = vmul.f32 %v96, %v192
    %v209 = vmul.f32 %v97, %v193
    %v210 = vmul.f32 %v98, %v194
    %v211 = vmul.f32 %v99, %v195
    %v212 = vmul.f32 %v100, %v196
    %v213 = vmul.f32 %v101, %v197
    %v214 = vmul.f32 %v102, %v198
    %v215 = vmul.f32 %v103, %v199
    %v216 = vmul.f32 %v104, %v200
    %v217 = vmul.f32 %v105, %v201
    %v218 = vmul.f32 %v106, %v202
    %v219 = vlaneseq
    %v220 = vshrl.u32 %v219, 7
    %v221 = vsub.s32 0, %v220
    %v222 = vrot.slane %v34, %v221
    %v223 = vmul.f32 %v203, %v222
    %v224 = vmul.f32 %v204, %v222
    %v225 = vmul.f32 %v205, %v222
    %v226 = vmul.f32 %v206, %v222
    %v227 = vmul.f32 %v207, %v222
    %v228 = vmul.f32 %v208, %v222
    %v229 = vmul.f32 %v209, %v222
    %v230 = vmul.f32 %v210, %v222
    %v231 = vmul.f32 %v211, %v222
    %v232 = vmul.f32 %v212, %v222
    %v233 = vmul.f32 %v213, %v222
    %v234 = vmul.f32 %v214, %v222
    %v235 = vmul.f32 %v215, %v222
    %v236 = vmul.f32 %v216, %v222
    %v237 = vmul.f32 %v217, %v222
    %v238 = vmul.f32 %v218, %v222
    %v239 = vlaneseq
    %v240 = vshrl.u32 %v239, 7
    %v241 = vsub.s32 0, %v240
    %v242 = vrot.slane %v35, %v241
    %v243 = vadd.f32 %v223, %v242
    %v244 = vadd.f32 %v224, %v242
    %v245 = vadd.f32 %v225, %v242
    %v246 = vadd.f32 %v226, %v242
    %v247 = vadd.f32 %v227, %v242
    %v248 = vadd.f32 %v228, %v242
    %v249 = vadd.f32 %v229, %v242
    %v250 = vadd.f32 %v230, %v242
    %v251 = vadd.f32 %v231, %v242
    %v252 = vadd.f32 %v232, %v242
    %v253 = vadd.f32 %v233, %v242
    %v254 = vadd.f32 %v234, %v242
    %v255 = vadd.f32 %v235, %v242
    %v256 = vadd.f32 %v236, %v242
    %v257 = vadd.f32 %v237, %v242
    %v258 = vadd.f32 %v238, %v242
    %v259 = vld [vmem:[%s1] sm:$0xff]
    %v260 = vld [vmem:[%s1 + $0x8] sm:$0xff]
    %v261 = vld [vmem:[%s1 + $0x10] sm:$0xff]
    %v262 = vld [vmem:[%s1 + $0x18] sm:$0xff]
    %v263 = vld [vmem:[%s1 + $0x20] sm:$0xff]
    %v264 = vld [vmem:[%s1 + $0x28] sm:$0xff]
    %v265 = vld [vmem:[%s1 + $0x30] sm:$0xff]
    %v266 = vld [vmem:[%s1 + $0x38] sm:$0xff]
    %v267 = vld [vmem:[%s1 + $0x40] sm:$0xff]
    %v268 = vld [vmem:[%s1 + $0x48] sm:$0xff]
    %v269 = vld [vmem:[%s1 + $0x50] sm:$0xff]
    %v270 = vld [vmem:[%s1 + $0x58] sm:$0xff]
    %v271 = vld [vmem:[%s1 + $0x60] sm:$0xff]
    %v272 = vld [vmem:[%s1 + $0x68] sm:$0xff]
    %v273 = vld [vmem:[%s1 + $0x70] sm:$0xff]
    %v274 = vld [vmem:[%s1 + $0x78] sm:$0xff]
    %v275 = vlaneseq
    %v276 = vshrl.u32 %v275, 7
    %v277 = vsub.s32 0, %v276
    %v278 = vrot.slane %v39, %v277
    %279 = vmatprep.subr.mxu0 0.0
    %280 = vmatpush1.msra.mxu0 %v259
    %281 = vmatprep.subr.mxu0 0.0
    %282 = vmatpush1.msra.mxu0 %v260
    %283 = vmatprep.subr.mxu0 0.0
    %284 = vmatpush1.msra.mxu0 %v261
    %285 = vmatprep.subr.mxu0 0.0
    %286 = vmatpush1.msra.mxu0 %v262
    %287 = vmatprep.subr.mxu0 0.0
    %288 = vmatpush1.msra.mxu0 %v263
    %289 = vmatprep.subr.mxu0 0.0
    %290 = vmatpush1.msra.mxu0 %v264
    %291 = vmatprep.subr.mxu0 0.0
    %292 = vmatpush1.msra.mxu0 %v265
    %293 = vmatprep.subr.mxu0 0.0
    %294 = vmatpush1.msra.mxu0 %v266
    %295 = vmatprep.subr.mxu0 0.0
    %296 = vmatpush1.msra.mxu0 %v267
    %297 = vmatprep.subr.mxu0 0.0
    %298 = vmatpush1.msra.mxu0 %v268
    %299 = vmatprep.subr.mxu0 0.0
    %300 = vmatpush1.msra.mxu0 %v269
    %301 = vmatprep.subr.mxu0 0.0
    %302 = vmatpush1.msra.mxu0 %v270
    %303 = vmatprep.subr.mxu0 0.0
    %304 = vmatpush1.msra.mxu0 %v271
    %305 = vmatprep.subr.mxu0 0.0
    %306 = vmatpush1.msra.mxu0 %v272
    %307 = vmatprep.subr.mxu0 0.0
    %308 = vmatpush1.msra.mxu0 %v273
    %309 = vmatprep.subr.mxu0 0.0
    %310 = vmatpush1.msra.mxu0 %v274
    %311 = vmatprep.subr.mxu0 0.0
    %312 = vmatpush1.msra.mxu0 0.0
    %313 = vmatprep.subr.mxu0 0.0
    %314 = vmatpush1.msra.mxu0 0.0
    %315 = vmatprep.subr.mxu0 0.0
    %316 = vmatpush1.msra.mxu0 0.0
    %317 = vmatprep.subr.mxu0 0.0
    %318 = vmatpush1.msra.mxu0 0.0
    %319 = vmatprep.subr.mxu0 0.0
    %320 = vmatpush1.msra.mxu0 0.0
    %321 = vmatprep.subr.mxu0 0.0
    %322 = vmatpush1.msra.mxu0 0.0
    %323 = vmatprep.subr.mxu0 0.0
    %324 = vmatpush1.msra.mxu0 0.0
    %325 = vmatprep.subr.mxu0 0.0
    %326 = vmatpush1.msra.mxu0 0.0
    %327 = vmatprep.subr.mxu0 0.0
    %328 = vmatpush1.msra.mxu0 0.0
    %329 = vmatprep.subr.mxu0 0.0
    %330 = vmatpush1.msra.mxu0 0.0
    %331 = vmatprep.subr.mxu0 0.0
    %332 = vmatpush1.msra.mxu0 0.0
    %333 = vmatprep.subr.mxu0 0.0
    %334 = vmatpush1.msra.mxu0 0.0
    %335 = vmatprep.subr.mxu0 0.0
    %336 = vmatpush1.msra.mxu0 0.0
    %337 = vmatprep.subr.mxu0 0.0
    %338 = vmatpush1.msra.mxu0 0.0
    %339 = vmatprep.subr.mxu0 0.0
    %340 = vmatpush1.msra.mxu0 0.0
    %341 = vmatprep.subr.mxu0 0.0
    %342 = vmatpush1.msra.mxu0 0.0
    %343 = vmatprep.mubr.f32.mxu0 0.0
    %344 = vmatmul.mubr.f32.gmra.mrb[0].mxu0 %v243
    %v345 = vpop.f32.mrb[0].mxu0
    %v346 = vadd.f32 %v278, %v345
    %v347 = vpop.f32.mrb[0].mxu0
    %348 = vmatprep.mubr.f32.mxu0 0.0
    %349 = vmatmul.mubr.f32.gmra.mrb[0].mxu0 %v244
    %v350 = vpop.f32.mrb[0].mxu0
    %v351 = vadd.f32 %v278, %v350
    %v352 = vpop.f32.mrb[0].mxu0
    %353 = vmatprep.mubr.f32.mxu0 0.0
    %354 = vmatmul.mubr.f32.gmra.mrb[0].mxu0 %v245
    %v355 = vpop.f32.mrb[0].mxu0
    %v356 = vadd.f32 %v278, %v355
    %v357 = vpop.f32.mrb[0].mxu0
    %358 = vmatprep.mubr.f32.mxu0 0.0
    %359 = vmatmul.mubr.f32.gmra.mrb[0].mxu0 %v246
    %v360 = vpop.f32.mrb[0].mxu0
    %v361 = vadd.f32 %v278, %v360
    %v362 = vpop.f32.mrb[0].mxu0
    %363 = vmatprep.mubr.f32.mxu0 0.0
    %364 = vmatmul.mubr.f32.gmra.mrb[0].mxu0 %v247
    %v365 = vpop.f32.mrb[0].mxu0
    %v366 = vadd.f32 %v278, %v365
    %v367 = vpop.f32.mrb[0].mxu0
    %368 = vmatprep.mubr.f32.mxu0 0.0
    %369 = vmatmul.mubr.f32.gmra.mrb[0].mxu0 %v248
    %v370 = vpop.f32.mrb[0].mxu0
    %v371 = vadd.f32 %v278, %v370
    %v372 = vpop.f32.mrb[0].mxu0
    %373 = vmatprep.mubr.f32.mxu0 0.0
    %374 = vmatmul.mubr.f32.gmra.mrb[0].mxu0 %v249
    %v375 = vpop.f32.mrb[0].mxu0
    %v376 = vadd.f32 %v278, %v375
    %v377 = vpop.f32.mrb[0].mxu0
    %378 = vmatprep.mubr.f32.mxu0 0.0
    %379 = vmatmul.mubr.f32.gmra.mrb[0].mxu0 %v250
    %v380 = vpop.f32.mrb[0].mxu0
    %v381 = vadd.f32 %v278, %v380
    %v382 = vpop.f32.mrb[0].mxu0
    %383 = vmatprep.mubr.f32.mxu0 0.0
    %384 = vmatmul.mubr.f32.gmra.mrb[0].mxu0 %v251
    %v385 = vpop.f32.mrb[0].mxu0
    %v386 = vadd.f32 %v278, %v385
    %v387 = vpop.f32.mrb[0].mxu0
    %388 = vmatprep.mubr.f32.mxu0 0.0
    %389 = vmatmul.mubr.f32.gmra.mrb[0].mxu0 %v252
    %v390 = vpop.f32.mrb[0].mxu0
    %v391 = vadd.f32 %v278, %v390
    %v392 = vpop.f32.mrb[0].mxu0
    %393 = vmatprep.mubr.f32.mxu0 0.0
    %394 = vmatmul.mubr.f32.gmra.mrb[0].mxu0 %v253
    %v395 = vpop.f32.mrb[0].mxu0
    %v396 = vadd.f32 %v278, %v395
    %v397 = vpop.f32.mrb[0].mxu0
    %398 = vmatprep.mubr.f32.mxu0 0.0
    %399 = vmatmul.mubr.f32.gmra.mrb[0].mxu0 %v254
    %v400 = vpop.f32.mrb[0].mxu0
    %v401 = vadd.f32 %v278, %v400
    %v402 = vpop.f32.mrb[0].mxu0
    %403 = vmatprep.mubr.f32.mxu0 0.0
    %404 = vmatmul.mubr.f32.gmra.mrb[0].mxu0 %v255
    %v405 = vpop.f32.mrb[0].mxu0
    %v406 = vadd.f32 %v278, %v405
    %v407 = vpop.f32.mrb[0].mxu0
    %408 = vmatprep.mubr.f32.mxu0 0.0
    %409 = vmatmul.mubr.f32.gmra.mrb[0].mxu0 %v256
    %v410 = vpop.f32.mrb[0].mxu0
    %v411 = vadd.f32 %v278, %v410
    %v412 = vpop.f32.mrb[0].mxu0
    %413 = vmatprep.mubr.f32.mxu0 0.0
    %414 = vmatmul.mubr.f32.gmra.mrb[0].mxu0 %v257
    %v415 = vpop.f32.mrb[0].mxu0
    %v416 = vadd.f32 %v278, %v415
    %v417 = vpop.f32.mrb[0].mxu0
    %418 = vmatprep.mubr.f32.mxu0 0.0
    %419 = vmatmul.mubr.f32.gmra.mrb[0].mxu0 %v258
    %v420 = vpop.f32.mrb[0].mxu0
    %v421 = vadd.f32 %v278, %v420
    %v422 = vpop.f32.mrb[0].mxu0
    %423 = vdwg.mxu0
    %v424 = vmul.f32 %v346, 0.5
    %v425 = vmul.f32 %v351, 0.5
    %v426 = vmul.f32 %v356, 0.5
    %v427 = vmul.f32 %v361, 0.5
    %v428 = vmul.f32 %v366, 0.5
    %v429 = vmul.f32 %v371, 0.5
    %v430 = vmul.f32 %v376, 0.5
    %v431 = vmul.f32 %v381, 0.5
    %v432 = vmul.f32 %v386, 0.5
    %v433 = vmul.f32 %v391, 0.5
    %v434 = vmul.f32 %v396, 0.5
    %v435 = vmul.f32 %v401, 0.5
    %v436 = vmul.f32 %v406, 0.5
    %v437 = vmul.f32 %v411, 0.5
    %v438 = vmul.f32 %v416, 0.5
    %v439 = vmul.f32 %v421, 0.5
    %v440 = vmul.f32 %v346, 0.70710677
    %v441 = vmul.f32 %v351, 0.70710677
    %v442 = vmul.f32 %v356, 0.70710677
    %v443 = vmul.f32 %v361, 0.70710677
    %v444 = vmul.f32 %v366, 0.70710677
    %v445 = vmul.f32 %v371, 0.70710677
    %v446 = vmul.f32 %v376, 0.70710677
    %v447 = vmul.f32 %v381, 0.70710677
    %v448 = vmul.f32 %v386, 0.70710677
    %v449 = vmul.f32 %v391, 0.70710677
    %v450 = vmul.f32 %v396, 0.70710677
    %v451 = vmul.f32 %v401, 0.70710677
    %v452 = vmul.f32 %v406, 0.70710677
    %v453 = vmul.f32 %v411, 0.70710677
    %v454 = vmul.f32 %v416, 0.70710677
    %v455 = vmul.f32 %v421, 0.70710677
    %v456 = vand.u32 2147483647, %v440
    %v457 = vand.u32 2147483647, %v441
    %v458 = vand.u32 2147483647, %v442
    %v459 = vand.u32 2147483647, %v443
    %v460 = vand.u32 2147483647, %v444
    %v461 = vand.u32 2147483647, %v445
    %v462 = vand.u32 2147483647, %v446
    %v463 = vand.u32 2147483647, %v447
    %v464 = vand.u32 2147483647, %v448
    %v465 = vand.u32 2147483647, %v449
    %v466 = vand.u32 2147483647, %v450
    %v467 = vand.u32 2147483647, %v451
    %v468 = vand.u32 2147483647, %v452
    %v469 = vand.u32 2147483647, %v453
    %v470 = vand.u32 2147483647, %v454
    %v471 = vand.u32 2147483647, %v455
    %v472 = vmul.f32 %v456, 0.3275911
    %v473 = vmul.f32 %v457, 0.3275911
    %v474 = vmul.f32 %v458, 0.3275911
    %v475 = vmul.f32 %v459, 0.3275911
    %v476 = vmul.f32 %v460, 0.3275911
    %v477 = vmul.f32 %v461, 0.3275911
    %v478 = vmul.f32 %v462, 0.3275911
    %v479 = vmul.f32 %v463, 0.3275911
    %v480 = vmul.f32 %v464, 0.3275911
    %v481 = vmul.f32 %v465, 0.3275911
    %v482 = vmul.f32 %v466, 0.3275911
    %v483 = vmul.f32 %v467, 0.3275911
    %v484 = vmul.f32 %v468, 0.3275911
    %v485 = vmul.f32 %v469, 0.3275911
    %v486 = vmul.f32 %v470, 0.3275911
    %v487 = vmul.f32 %v471, 0.3275911
    %v488 = vadd.f32 %v472, 1.0
    %v489 = vadd.f32 %v473, 1.0
    %v490 = vadd.f32 %v474, 1.0
    %v491 = vadd.f32 %v475, 1.0
    %v492 = vadd.f32 %v476, 1.0
    %v493 = vadd.f32 %v477, 1.0
    %v494 = vadd.f32 %v478, 1.0
    %v495 = vadd.f32 %v479, 1.0
    %v496 = vadd.f32 %v480, 1.0
    %v497 = vadd.f32 %v481, 1.0
    %v498 = vadd.f32 %v482, 1.0
    %v499 = vadd.f32 %v483, 1.0
    %v500 = vadd.f32 %v484, 1.0
    %v501 = vadd.f32 %v485, 1.0
    %v502 = vadd.f32 %v486, 1.0
    %v503 = vadd.f32 %v487, 1.0
    %v504 = vrcp.pop %v488
    %v505 = vrcp.pop %v489
    %v506 = vrcp.pop %v490
    %v507 = vrcp.pop %v491
    %v508 = vrcp.pop %v492
    %v509 = vrcp.pop %v493
    %v510 = vrcp.pop %v494
    %v511 = vrcp.pop %v495
    %v512 = vrcp.pop %v496
    %v513 = vrcp.pop %v497
    %v514 = vrcp.pop %v498
    %v515 = vrcp.pop %v499
    %v516 = vrcp.pop %v500
    %v517 = vrcp.pop %v501
    %v518 = vrcp.pop %v502
    %v519 = vrcp.pop %v503
    %v520 = vmul.f32 %v504, 1.0614054
    %v521 = vmul.f32 %v505, 1.0614054
    %v522 = vmul.f32 %v506, 1.0614054
    %v523 = vmul.f32 %v507, 1.0614054
    %v524 = vmul.f32 %v508, 1.0614054
    %v525 = vmul.f32 %v509, 1.0614054
    %v526 = vmul.f32 %v510, 1.0614054
    %v527 = vmul.f32 %v511, 1.0614054
    %v528 = vmul.f32 %v512, 1.0614054
    %v529 = vmul.f32 %v513, 1.0614054
    %v530 = vmul.f32 %v514, 1.0614054
    %v531 = vmul.f32 %v515, 1.0614054
    %v532 = vmul.f32 %v516, 1.0614054
    %v533 = vmul.f32 %v517, 1.0614054
    %v534 = vmul.f32 %v518, 1.0614054
    %v535 = vmul.f32 %v519, 1.0614054
    %v536 = vadd.f32 %v520, -1.4531521
    %v537 = vadd.f32 %v521, -1.4531521
    %v538 = vadd.f32 %v522, -1.4531521
    %v539 = vadd.f32 %v523, -1.4531521
    %v540 = vadd.f32 %v524, -1.4531521
    %v541 = vadd.f32 %v525, -1.4531521
    %v542 = vadd.f32 %v526, -1.4531521
    %v543 = vadd.f32 %v527, -1.4531521
    %v544 = vadd.f32 %v528, -1.4531521
    %v545 = vadd.f32 %v529, -1.4531521
    %v546 = vadd.f32 %v530, -1.4531521
    %v547 = vadd.f32 %v531, -1.4531521
    %v548 = vadd.f32 %v532, -1.4531521
    %v549 = vadd.f32 %v533, -1.4531521
    %v550 = vadd.f32 %v534, -1.4531521
    %v551 = vadd.f32 %v535, -1.4531521
    %v552 = vmul.f32 %v504, %v536
    %v553 = vmul.f32 %v505, %v537
    %v554 = vmul.f32 %v506, %v538
    %v555 = vmul.f32 %v507, %v539
    %v556 = vmul.f32 %v508, %v540
    %v557 = vmul.f32 %v509, %v541
    %v558 = vmul.f32 %v510, %v542
    %v559 = vmul.f32 %v511, %v543
    %v560 = vmul.f32 %v512, %v544
    %v561 = vmul.f32 %v513, %v545
    %v562 = vmul.f32 %v514, %v546
    %v563 = vmul.f32 %v515, %v547
    %v564 = vmul.f32 %v516, %v548
    %v565 = vmul.f32 %v517, %v549
    %v566 = vmul.f32 %v518, %v550
    %v567 = vmul.f32 %v519, %v551
    %v568 = vadd.f32 %v552, 1.4214138
    %v569 = vadd.f32 %v553, 1.4214138
    %v570 = vadd.f32 %v554, 1.4214138
    %v571 = vadd.f32 %v555, 1.4214138
    %v572 = vadd.f32 %v556, 1.4214138
    %v573 = vadd.f32 %v557, 1.4214138
    %v574 = vadd.f32 %v558, 1.4214138
    %v575 = vadd.f32 %v559, 1.4214138
    %v576 = vadd.f32 %v560, 1.4214138
    %v577 = vadd.f32 %v561, 1.4214138
    %v578 = vadd.f32 %v562, 1.4214138
    %v579 = vadd.f32 %v563, 1.4214138
    %v580 = vadd.f32 %v564, 1.4214138
    %v581 = vadd.f32 %v565, 1.4214138
    %v582 = vadd.f32 %v566, 1.4214138
    %v583 = vadd.f32 %v567, 1.4214138
    %v584 = vmul.f32 %v504, %v568
    %v585 = vmul.f32 %v505, %v569
    %v586 = vmul.f32 %v506, %v570
    %v587 = vmul.f32 %v507, %v571
    %v588 = vmul.f32 %v508, %v572
    %v589 = vmul.f32 %v509, %v573
    %v590 = vmul.f32 %v510, %v574
    %v591 = vmul.f32 %v511, %v575
    %v592 = vmul.f32 %v512, %v576
    %v593 = vmul.f32 %v513, %v577
    %v594 = vmul.f32 %v514, %v578
    %v595 = vmul.f32 %v515, %v579
    %v596 = vmul.f32 %v516, %v580
    %v597 = vmul.f32 %v517, %v581
    %v598 = vmul.f32 %v518, %v582
    %v599 = vmul.f32 %v519, %v583
    %v600 = vadd.f32 %v584, -0.28449672
    %v601 = vadd.f32 %v585, -0.28449672
    %v602 = vadd.f32 %v586, -0.28449672
    %v603 = vadd.f32 %v587, -0.28449672
    %v604 = vadd.f32 %v588, -0.28449672
    %v605 = vadd.f32 %v589, -0.28449672
    %v606 = vadd.f32 %v590, -0.28449672
    %v607 = vadd.f32 %v591, -0.28449672
    %v608 = vadd.f32 %v592, -0.28449672
    %v609 = vadd.f32 %v593, -0.28449672
    %v610 = vadd.f32 %v594, -0.28449672
    %v611 = vadd.f32 %v595, -0.28449672
    %v612 = vadd.f32 %v596, -0.28449672
    %v613 = vadd.f32 %v597, -0.28449672
    %v614 = vadd.f32 %v598, -0.28449672
    %v615 = vadd.f32 %v599, -0.28449672
    %v616 = vmul.f32 %v504, %v600
    %v617 = vmul.f32 %v505, %v601
    %v618 = vmul.f32 %v506, %v602
    %v619 = vmul.f32 %v507, %v603
    %v620 = vmul.f32 %v508, %v604
    %v621 = vmul.f32 %v509, %v605
    %v622 = vmul.f32 %v510, %v606
    %v623 = vmul.f32 %v511, %v607
    %v624 = vmul.f32 %v512, %v608
    %v625 = vmul.f32 %v513, %v609
    %v626 = vmul.f32 %v514, %v610
    %v627 = vmul.f32 %v515, %v611
    %v628 = vmul.f32 %v516, %v612
    %v629 = vmul.f32 %v517, %v613
    %v630 = vmul.f32 %v518, %v614
    %v631 = vmul.f32 %v519, %v615
    %v632 = vadd.f32 %v616, 0.2548296
    %v633 = vadd.f32 %v617, 0.2548296
    %v634 = vadd.f32 %v618, 0.2548296
    %v635 = vadd.f32 %v619, 0.2548296
    %v636 = vadd.f32 %v620, 0.2548296
    %v637 = vadd.f32 %v621, 0.2548296
    %v638 = vadd.f32 %v622, 0.2548296
    %v639 = vadd.f32 %v623, 0.2548296
    %v640 = vadd.f32 %v624, 0.2548296
    %v641 = vadd.f32 %v625, 0.2548296
    %v642 = vadd.f32 %v626, 0.2548296
    %v643 = vadd.f32 %v627, 0.2548296
    %v644 = vadd.f32 %v628, 0.2548296
    %v645 = vadd.f32 %v629, 0.2548296
    %v646 = vadd.f32 %v630, 0.2548296
    %v647 = vadd.f32 %v631, 0.2548296
    %v648 = vmul.f32 %v504, %v632
    %v649 = vmul.f32 %v505, %v633
    %v650 = vmul.f32 %v506, %v634
    %v651 = vmul.f32 %v507, %v635
    %v652 = vmul.f32 %v508, %v636
    %v653 = vmul.f32 %v509, %v637
    %v654 = vmul.f32 %v510, %v638
    %v655 = vmul.f32 %v511, %v639
    %v656 = vmul.f32 %v512, %v640
    %v657 = vmul.f32 %v513, %v641
    %v658 = vmul.f32 %v514, %v642
    %v659 = vmul.f32 %v515, %v643
    %v660 = vmul.f32 %v516, %v644
    %v661 = vmul.f32 %v517, %v645
    %v662 = vmul.f32 %v518, %v646
    %v663 = vmul.f32 %v519, %v647
    %v664 = vsub.f32 0.0, %v456
    %v665 = vsub.f32 0.0, %v457
    %v666 = vsub.f32 0.0, %v458
    %v667 = vsub.f32 0.0, %v459
    %v668 = vsub.f32 0.0, %v460
    %v669 = vsub.f32 0.0, %v461
    %v670 = vsub.f32 0.0, %v462
    %v671 = vsub.f32 0.0, %v463
    %v672 = vsub.f32 0.0, %v464
    %v673 = vsub.f32 0.0, %v465
    %v674 = vsub.f32 0.0, %v466
    %v675 = vsub.f32 0.0, %v467
    %v676 = vsub.f32 0.0, %v468
    %v677 = vsub.f32 0.0, %v469
    %v678 = vsub.f32 0.0, %v470
    %v679 = vsub.f32 0.0, %v471
    %v680 = vmul.f32 %v664, %v456
    %v681 = vmul.f32 %v665, %v457
    %v682 = vmul.f32 %v666, %v458
    %v683 = vmul.f32 %v667, %v459
    %v684 = vmul.f32 %v668, %v460
    %v685 = vmul.f32 %v669, %v461
    %v686 = vmul.f32 %v670, %v462
    %v687 = vmul.f32 %v671, %v463
    %v688 = vmul.f32 %v672, %v464
    %v689 = vmul.f32 %v673, %v465
    %v690 = vmul.f32 %v674, %v466
    %v691 = vmul.f32 %v675, %v467
    %v692 = vmul.f32 %v676, %v468
    %v693 = vmul.f32 %v677, %v469
    %v694 = vmul.f32 %v678, %v470
    %v695 = vmul.f32 %v679, %v471
    %v696 = vmul.f32 %v680, 1.442695
    %v697 = vpow.pop %v696
    %v698 = vmul.f32 %v681, 1.442695
    %v699 = vpow.pop %v698
    %v700 = vmul.f32 %v682, 1.442695
    %v701 = vpow.pop %v700
    %v702 = vmul.f32 %v683, 1.442695
    %v703 = vpow.pop %v702
    %v704 = vmul.f32 %v684, 1.442695
    %v705 = vpow.pop %v704
    %v706 = vmul.f32 %v685, 1.442695
    %v707 = vpow.pop %v706
    %v708 = vmul.f32 %v686, 1.442695
    %v709 = vpow.pop %v708
    %v710 = vmul.f32 %v687, 1.442695
    %v711 = vpow.pop %v710
    %v712 = vmul.f32 %v688, 1.442695
    %v713 = vpow.pop %v712
    %v714 = vmul.f32 %v689, 1.442695
    %v715 = vpow.pop %v714
    %v716 = vmul.f32 %v690, 1.442695
    %v717 = vpow.pop %v716
    %v718 = vmul.f32 %v691, 1.442695
    %v719 = vpow.pop %v718
    %v720 = vmul.f32 %v692, 1.442695
    %v721 = vpow.pop %v720
    %v722 = vmul.f32 %v693, 1.442695
    %v723 = vpow.pop %v722
    %v724 = vmul.f32 %v694, 1.442695
    %v725 = vpow.pop %v724
    %v726 = vmul.f32 %v695, 1.442695
    %v727 = vpow.pop %v726
    %v728 = vmul.f32 %v648, %v697
    %v729 = vmul.f32 %v649, %v699
    %v730 = vmul.f32 %v650, %v701
    %v731 = vmul.f32 %v651, %v703
    %v732 = vmul.f32 %v652, %v705
    %v733 = vmul.f32 %v653, %v707
    %v734 = vmul.f32 %v654, %v709
    %v735 = vmul.f32 %v655, %v711
    %v736 = vmul.f32 %v656, %v713
    %v737 = vmul.f32 %v657, %v715
    %v738 = vmul.f32 %v658, %v717
    %v739 = vmul.f32 %v659, %v719
    %v740 = vmul.f32 %v660, %v721
    %v741 = vmul.f32 %v661, %v723
    %v742 = vmul.f32 %v662, %v725
    %v743 = vmul.f32 %v663, %v727
    %v744 = vsub.f32 1.0, %v728
    %v745 = vsub.f32 1.0, %v729
    %v746 = vsub.f32 1.0, %v730
    %v747 = vsub.f32 1.0, %v731
    %v748 = vsub.f32 1.0, %v732
    %v749 = vsub.f32 1.0, %v733
    %v750 = vsub.f32 1.0, %v734
    %v751 = vsub.f32 1.0, %v735
    %v752 = vsub.f32 1.0, %v736
    %v753 = vsub.f32 1.0, %v737
    %v754 = vsub.f32 1.0, %v738
    %v755 = vsub.f32 1.0, %v739
    %v756 = vsub.f32 1.0, %v740
    %v757 = vsub.f32 1.0, %v741
    %v758 = vsub.f32 1.0, %v742
    %v759 = vsub.f32 1.0, %v743
    %vm760 = vcmp.lt.f32.partialorder %v440, 0.0
    %vm761 = vcmp.lt.f32.partialorder %v441, 0.0
    %vm762 = vcmp.lt.f32.partialorder %v442, 0.0
    %vm763 = vcmp.lt.f32.partialorder %v443, 0.0
    %vm764 = vcmp.lt.f32.partialorder %v444, 0.0
    %vm765 = vcmp.lt.f32.partialorder %v445, 0.0
    %vm766 = vcmp.lt.f32.partialorder %v446, 0.0
    %vm767 = vcmp.lt.f32.partialorder %v447, 0.0
    %vm768 = vcmp.lt.f32.partialorder %v448, 0.0
    %vm769 = vcmp.lt.f32.partialorder %v449, 0.0
    %vm770 = vcmp.lt.f32.partialorder %v450, 0.0
    %vm771 = vcmp.lt.f32.partialorder %v451, 0.0
    %vm772 = vcmp.lt.f32.partialorder %v452, 0.0
    %vm773 = vcmp.lt.f32.partialorder %v453, 0.0
    %vm774 = vcmp.lt.f32.partialorder %v454, 0.0
    %vm775 = vcmp.lt.f32.partialorder %v455, 0.0
    %v776 = vsub.f32 0.0, %v744
    %v777 = vsub.f32 0.0, %v745
    %v778 = vsub.f32 0.0, %v746
    %v779 = vsub.f32 0.0, %v747
    %v780 = vsub.f32 0.0, %v748
    %v781 = vsub.f32 0.0, %v749
    %v782 = vsub.f32 0.0, %v750
    %v783 = vsub.f32 0.0, %v751
    %v784 = vsub.f32 0.0, %v752
    %v785 = vsub.f32 0.0, %v753
    %v786 = vsub.f32 0.0, %v754
    %v787 = vsub.f32 0.0, %v755
    %v788 = vsub.f32 0.0, %v756
    %v789 = vsub.f32 0.0, %v757
    %v790 = vsub.f32 0.0, %v758
    %v791 = vsub.f32 0.0, %v759
    %v792 = vsel %vm760, %v776, %v744
    %v793 = vsel %vm761, %v777, %v745
    %v794 = vsel %vm762, %v778, %v746
    %v795 = vsel %vm763, %v779, %v747
    %v796 = vsel %vm764, %v780, %v748
    %v797 = vsel %vm765, %v781, %v749
    %v798 = vsel %vm766, %v782, %v750
    %v799 = vsel %vm767, %v783, %v751
    %v800 = vsel %vm768, %v784, %v752
    %v801 = vsel %vm769, %v785, %v753
    %v802 = vsel %vm770, %v786, %v754
    %v803 = vsel %vm771, %v787, %v755
    %v804 = vsel %vm772, %v788, %v756
    %v805 = vsel %vm773, %v789, %v757
    %v806 = vsel %vm774, %v790, %v758
    %v807 = vsel %vm775, %v791, %v759
    %v808 = vadd.f32 %v792, 1.0
    %v809 = vadd.f32 %v793, 1.0
    %v810 = vadd.f32 %v794, 1.0
    %v811 = vadd.f32 %v795, 1.0
    %v812 = vadd.f32 %v796, 1.0
    %v813 = vadd.f32 %v797, 1.0
    %v814 = vadd.f32 %v798, 1.0
    %v815 = vadd.f32 %v799, 1.0
    %v816 = vadd.f32 %v800, 1.0
    %v817 = vadd.f32 %v801, 1.0
    %v818 = vadd.f32 %v802, 1.0
    %v819 = vadd.f32 %v803, 1.0
    %v820 = vadd.f32 %v804, 1.0
    %v821 = vadd.f32 %v805, 1.0
    %v822 = vadd.f32 %v806, 1.0
    %v823 = vadd.f32 %v807, 1.0
    %v824 = vmul.f32 %v424, %v808
    %v825 = vmul.f32 %v425, %v809
    %v826 = vmul.f32 %v426, %v810
    %v827 = vmul.f32 %v427, %v811
    %v828 = vmul.f32 %v428, %v812
    %v829 = vmul.f32 %v429, %v813
    %v830 = vmul.f32 %v430, %v814
    %v831 = vmul.f32 %v431, %v815
    %v832 = vmul.f32 %v432, %v816
    %v833 = vmul.f32 %v433, %v817
    %v834 = vmul.f32 %v434, %v818
    %v835 = vmul.f32 %v435, %v819
    %v836 = vmul.f32 %v436, %v820
    %v837 = vmul.f32 %v437, %v821
    %v838 = vmul.f32 %v438, %v822
    %v839 = vmul.f32 %v439, %v823
    %vm840 = vcmask 261248
    %v841 = vsel %vm840, %v346, 0.0
    %v842 = vsel %vm840, %v351, 0.0
    %v843 = vadd.f32 %v841, %v842
    %v844 = vsel %vm840, %v356, 0.0
    %v845 = vadd.f32 %v843, %v844
    %v846 = vsel %vm840, %v361, 0.0
    %v847 = vadd.f32 %v845, %v846
    %v848 = vsel %vm840, %v366, 0.0
    %v849 = vadd.f32 %v847, %v848
    %v850 = vsel %vm840, %v371, 0.0
    %v851 = vadd.f32 %v849, %v850
    %v852 = vsel %vm840, %v376, 0.0
    %v853 = vadd.f32 %v851, %v852
    %v854 = vsel %vm840, %v381, 0.0
    %v855 = vadd.f32 %v853, %v854
    %v856 = vrot.slane %v855, 4
    %v857 = vadd.f32 %v855, %v856
    %v858 = vrot.slane %v857, 2
    %v859 = vadd.f32 %v857, %v858
    %v860 = vrot.slane %v859, 1
    %v861 = vadd.f32 %v859, %v860
    %v862 = vsel %vm840, %v386, 0.0
    %v863 = vsel %vm840, %v391, 0.0
    %v864 = vadd.f32 %v862, %v863
    %v865 = vsel %vm840, %v396, 0.0
    %v866 = vadd.f32 %v864, %v865
    %v867 = vsel %vm840, %v401, 0.0
    %v868 = vadd.f32 %v866, %v867
    %v869 = vsel %vm840, %v406, 0.0
    %v870 = vadd.f32 %v868, %v869
    %v871 = vsel %vm840, %v411, 0.0
    %v872 = vadd.f32 %v870, %v871
    %v873 = vsel %vm840, %v416, 0.0
    %v874 = vadd.f32 %v872, %v873
    %v875 = vsel %vm840, %v421, 0.0
    %v876 = vadd.f32 %v874, %v875
    %v877 = vrot.slane %v876, 4
    %v878 = vadd.f32 %v876, %v877
    %v879 = vrot.slane %v878, 2
    %v880 = vadd.f32 %v878, %v879
    %v881 = vrot.slane %v880, 1
    %v882 = vadd.f32 %v880, %v881
    %v883 = vrcp.pop 64.0
    %v884 = vmul.f32 %v861, %v883
    %v885 = vmul.f32 %v882, %v883
    %v886 = vmul.f32 %v884, 0.5
    %v887 = vmul.f32 %v885, 0.5
    %v888 = vmul.f32 %v884, 0.70710677
    %v889 = vmul.f32 %v885, 0.70710677
    %v890 = vand.u32 2147483647, %v888
    %v891 = vand.u32 2147483647, %v889
    %v892 = vmul.f32 %v890, 0.3275911
    %v893 = vmul.f32 %v891, 0.3275911
    %v894 = vadd.f32 %v892, 1.0
    %v895 = vadd.f32 %v893, 1.0
    %v896 = vrcp.pop %v894
    %v897 = vrcp.pop %v895
    %v898 = vmul.f32 %v896, 1.0614054
    %v899 = vmul.f32 %v897, 1.0614054
    %v900 = vadd.f32 %v898, -1.4531521
    %v901 = vadd.f32 %v899, -1.4531521
    %v902 = vmul.f32 %v896, %v900
    %v903 = vmul.f32 %v897, %v901
    %v904 = vadd.f32 %v902, 1.4214138
    %v905 = vadd.f32 %v903, 1.4214138
    %v906 = vmul.f32 %v896, %v904
    %v907 = vmul.f32 %v897, %v905
    %v908 = vadd.f32 %v906, -0.28449672
    %v909 = vadd.f32 %v907, -0.28449672
    %v910 = vmul.f32 %v896, %v908
    %v911 = vmul.f32 %v897, %v909
    %v912 = vadd.f32 %v910, 0.2548296
    %v913 = vadd.f32 %v911, 0.2548296
    %v914 = vmul.f32 %v896, %v912
    %v915 = vmul.f32 %v897, %v913
    %v916 = vsub.f32 0.0, %v890
    %v917 = vsub.f32 0.0, %v891
    %v918 = vmul.f32 %v916, %v890
    %v919 = vmul.f32 %v917, %v891
    %v920 = vmul.f32 %v918, 1.442695
    %v921 = vpow.pop %v920
    %v922 = vmul.f32 %v919, 1.442695
    %v923 = vpow.pop %v922
    %v924 = vmul.f32 %v914, %v921
    %v925 = vmul.f32 %v915, %v923
    %v926 = vsub.f32 1.0, %v924
    %v927 = vsub.f32 1.0, %v925
    %vm928 = vcmp.lt.f32.partialorder %v888, 0.0
    %vm929 = vcmp.lt.f32.partialorder %v889, 0.0
    %v930 = vsub.f32 0.0, %v926
    %v931 = vsub.f32 0.0, %v927
    %v932 = vsel %vm928, %v930, %v926
    %v933 = vsel %vm929, %v931, %v927
    %v934 = vadd.f32 %v932, 1.0
    %v935 = vadd.f32 %v933, 1.0
    %v936 = vmul.f32 %v886, %v934
    %v937 = vmul.f32 %v887, %v935
    %s939 = sor.u32 256, 16
    %940 = vbcast.lane.b32.xlu0 %v936, %s939
    %v941 = vpop.permute.xlu0 %940
    %s943 = sor.u32 256, 24
    %944 = vbcast.lane.b32.xlu0 %v936, %s943
    %v945 = vpop.permute.xlu0 %944
    %s947 = sor.u32 256, 16
    %948 = vbcast.lane.b32.xlu0 %v937, %s947
    %v949 = vpop.permute.xlu0 %948
    %s951 = sor.u32 256, 24
    %952 = vbcast.lane.b32.xlu0 %v937, %s951
    %v953 = vpop.permute.xlu0 %952
    %v954 = vmul.f32 %v941, %v37
    %v955 = vmul.f32 %v945, %v38
    %v956 = vmul.f32 %v949, %v37
    %v957 = vmul.f32 %v953, %v38
    %v958 = vadd.f32 %v954, %v955
    %v959 = vrot.slane %v958, 4
    %v960 = vadd.f32 %v958, %v959
    %v961 = vrot.slane %v960, 2
    %v962 = vadd.f32 %v960, %v961
    %v963 = vrot.slane %v962, 1
    %v964 = vadd.f32 %v962, %v963
    %v965 = vadd.f32 %v956, %v957
    %v966 = vrot.slane %v965, 4
    %v967 = vadd.f32 %v965, %v966
    %v968 = vrot.slane %v967, 2
    %v969 = vadd.f32 %v967, %v968
    %v970 = vrot.slane %v969, 1
    %v971 = vadd.f32 %v969, %v970
    %v972 = vlaneseq
    %v973 = vshrl.u32 %v972, 7
    %v974 = vsub.s32 0, %v973
    %v975 = vrot.slane %v36, %v974
    %v976 = vadd.f32 %v964, %v975
    %v977 = vadd.f32 %v971, %v975
    %v978 = vxor.u32 %v976, 2147483648
    %v979 = vxor.u32 %v977, 2147483648
    %v980 = vmul.f32 %v978, 1.442695
    %v981 = vpow.pop %v980
    %v982 = vmul.f32 %v979, 1.442695
    %v983 = vpow.pop %v982
    %v984 = vadd.f32 %v981, 1.0
    %v985 = vadd.f32 %v983, 1.0
    %v986 = vrcp.pop %v984
    %v987 = vmul.f32 1.0, %v986
    %v988 = vrcp.pop %v985
    %v989 = vmul.f32 1.0, %v988
    %v990 = vlaneseq
    %v991 = vshrl.u32 %v990, 7
    %v992 = vsub.s32 0, %v991
    %v993 = vrot.slane %v40, %v992
    %v994 = vmul.f32 %v824, %v993
    %v995 = vmul.f32 %v825, %v993
    %v996 = vmul.f32 %v826, %v993
    %v997 = vmul.f32 %v827, %v993
    %v998 = vmul.f32 %v828, %v993
    %v999 = vmul.f32 %v829, %v993
    %v1000 = vmul.f32 %v830, %v993
    %v1001 = vmul.f32 %v831, %v993
    %v1002 = vmul.f32 %v832, %v993
    %v1003 = vmul.f32 %v833, %v993
    %v1004 = vmul.f32 %v834, %v993
    %v1005 = vmul.f32 %v835, %v993
    %v1006 = vmul.f32 %v836, %v993
    %v1007 = vmul.f32 %v837, %v993
    %v1008 = vmul.f32 %v838, %v993
    %v1009 = vmul.f32 %v839, %v993
    %vm1010 = vcmask 130048
    %v1011 = vsel %vm1010, %v994, 0.0
    %1012 = vadd.xlane.f32.xlu0 %v1011
    %v1013 = vpop.xlane.xlu0 %1012
    %v1014 = vsel %vm1010, %v995, 0.0
    %1015 = vadd.xlane.f32.xlu0 %v1014
    %v1016 = vpop.xlane.xlu0 %1015
    %v1017 = vsel %vm1010, %v996, 0.0
    %1018 = vadd.xlane.f32.xlu0 %v1017
    %v1019 = vpop.xlane.xlu0 %1018
    %v1020 = vsel %vm1010, %v997, 0.0
    %1021 = vadd.xlane.f32.xlu0 %v1020
    %v1022 = vpop.xlane.xlu0 %1021
    %v1023 = vsel %vm1010, %v998, 0.0
    %1024 = vadd.xlane.f32.xlu0 %v1023
    %v1025 = vpop.xlane.xlu0 %1024
    %v1026 = vsel %vm1010, %v999, 0.0
    %1027 = vadd.xlane.f32.xlu0 %v1026
    %v1028 = vpop.xlane.xlu0 %1027
    %v1029 = vsel %vm1010, %v1000, 0.0
    %1030 = vadd.xlane.f32.xlu0 %v1029
    %v1031 = vpop.xlane.xlu0 %1030
    %v1032 = vsel %vm1010, %v1001, 0.0
    %1033 = vadd.xlane.f32.xlu0 %v1032
    %v1034 = vpop.xlane.xlu0 %1033
    %v1035 = vsel %vm1010, %v1002, 0.0
    %1036 = vadd.xlane.f32.xlu0 %v1035
    %v1037 = vpop.xlane.xlu0 %1036
    %v1038 = vsel %vm1010, %v1003, 0.0
    %1039 = vadd.xlane.f32.xlu0 %v1038
    %v1040 = vpop.xlane.xlu0 %1039
    %v1041 = vsel %vm1010, %v1004, 0.0
    %1042 = vadd.xlane.f32.xlu0 %v1041
    %v1043 = vpop.xlane.xlu0 %1042
    %v1044 = vsel %vm1010, %v1005, 0.0
    %1045 = vadd.xlane.f32.xlu0 %v1044
    %v1046 = vpop.xlane.xlu0 %1045
    %v1047 = vsel %vm1010, %v1006, 0.0
    %1048 = vadd.xlane.f32.xlu0 %v1047
    %v1049 = vpop.xlane.xlu0 %1048
    %v1050 = vsel %vm1010, %v1007, 0.0
    %1051 = vadd.xlane.f32.xlu0 %v1050
    %v1052 = vpop.xlane.xlu0 %1051
    %v1053 = vsel %vm1010, %v1008, 0.0
    %1054 = vadd.xlane.f32.xlu0 %v1053
    %v1055 = vpop.xlane.xlu0 %1054
    %v1056 = vsel %vm1010, %v1009, 0.0
    %1057 = vadd.xlane.f32.xlu0 %v1056
    %v1058 = vpop.xlane.xlu0 %1057
    %v1059 = vmul.f32 %v936, %v993
    %v1060 = vmul.f32 %v937, %v993
    %v1063 = vrot.slane %v1060, 7
    %vm1064 = vcmask 1041409
    %v1065 = vsel %vm1064, %v1063, %v1059
    %1066 = vrot.lane.b32.xlu0 %v1065, 112
    %v1067 = vpop.permute.xlu0 %1066
    %vm1069 = vcmask 123904
    %v1070 = vsel %vm1069, %v1067, 0.0
    %1071 = vadd.xlane.f32.xlu0 %v1070
    %v1072 = vpop.xlane.xlu0 %1071
    %v1074 = vlaneseq
    %v1075 = vshrl.u32 %v1074, 7
    %v1076 = vsub.s32 0, %v1075
    %v1077 = vrot.slane %v1072, %v1076
    %v1078 = vlaneseq
    %v1079 = vshrl.u32 %v1078, 7
    %v1080 = vsub.s32 1, %v1079
    %v1081 = vrot.slane %v1072, %v1080
    %v1084 = vadd.f32 %v1013, %v1077
    %v1085 = vadd.f32 %v1016, %v1077
    %v1086 = vadd.f32 %v1019, %v1077
    %v1087 = vadd.f32 %v1022, %v1077
    %v1088 = vadd.f32 %v1025, %v1077
    %v1089 = vadd.f32 %v1028, %v1077
    %v1090 = vadd.f32 %v1031, %v1077
    %v1091 = vadd.f32 %v1034, %v1077
    %v1092 = vadd.f32 %v1037, %v1081
    %v1093 = vadd.f32 %v1040, %v1081
    %v1094 = vadd.f32 %v1043, %v1081
    %v1095 = vadd.f32 %v1046, %v1081
    %v1096 = vadd.f32 %v1049, %v1081
    %v1097 = vadd.f32 %v1052, %v1081
    %v1098 = vadd.f32 %v1055, %v1081
    %v1099 = vadd.f32 %v1058, %v1081
    %v1100 = vlaneseq
    %v1101 = vshrl.u32 %v1100, 7
    %v1102 = vsub.s32 0, %v1101
    %v1103 = vrot.slane %v41, %v1102
    %v1104 = vadd.f32 %v1084, %v1103
    %v1105 = vadd.f32 %v1085, %v1103
    %v1106 = vadd.f32 %v1086, %v1103
    %v1107 = vadd.f32 %v1087, %v1103
    %v1108 = vadd.f32 %v1088, %v1103
    %v1109 = vadd.f32 %v1089, %v1103
    %v1110 = vadd.f32 %v1090, %v1103
    %v1111 = vadd.f32 %v1091, %v1103
    %v1112 = vadd.f32 %v1092, %v1103
    %v1113 = vadd.f32 %v1093, %v1103
    %v1114 = vadd.f32 %v1094, %v1103
    %v1115 = vadd.f32 %v1095, %v1103
    %v1116 = vadd.f32 %v1096, %v1103
    %v1117 = vadd.f32 %v1097, %v1103
    %v1118 = vadd.f32 %v1098, %v1103
    %v1119 = vadd.f32 %v1099, %v1103
    %v1120 = vxor.u32 %v1104, 2147483648
    %v1121 = vxor.u32 %v1105, 2147483648
    %v1122 = vxor.u32 %v1106, 2147483648
    %v1123 = vxor.u32 %v1107, 2147483648
    %v1124 = vxor.u32 %v1108, 2147483648
    %v1125 = vxor.u32 %v1109, 2147483648
    %v1126 = vxor.u32 %v1110, 2147483648
    %v1127 = vxor.u32 %v1111, 2147483648
    %v1128 = vxor.u32 %v1112, 2147483648
    %v1129 = vxor.u32 %v1113, 2147483648
    %v1130 = vxor.u32 %v1114, 2147483648
    %v1131 = vxor.u32 %v1115, 2147483648
    %v1132 = vxor.u32 %v1116, 2147483648
    %v1133 = vxor.u32 %v1117, 2147483648
    %v1134 = vxor.u32 %v1118, 2147483648
    %v1135 = vxor.u32 %v1119, 2147483648
    %v1136 = vmul.f32 %v1120, 1.442695
    %v1137 = vpow.pop %v1136
    %v1138 = vmul.f32 %v1121, 1.442695
    %v1139 = vpow.pop %v1138
    %v1140 = vmul.f32 %v1122, 1.442695
    %v1141 = vpow.pop %v1140
    %v1142 = vmul.f32 %v1123, 1.442695
    %v1143 = vpow.pop %v1142
    %v1144 = vmul.f32 %v1124, 1.442695
    %v1145 = vpow.pop %v1144
    %v1146 = vmul.f32 %v1125, 1.442695
    %v1147 = vpow.pop %v1146
    %v1148 = vmul.f32 %v1126, 1.442695
    %v1149 = vpow.pop %v1148
    %v1150 = vmul.f32 %v1127, 1.442695
    %v1151 = vpow.pop %v1150
    %v1152 = vmul.f32 %v1128, 1.442695
    %v1153 = vpow.pop %v1152
    %v1154 = vmul.f32 %v1129, 1.442695
    %v1155 = vpow.pop %v1154
    %v1156 = vmul.f32 %v1130, 1.442695
    %v1157 = vpow.pop %v1156
    %v1158 = vmul.f32 %v1131, 1.442695
    %v1159 = vpow.pop %v1158
    %v1160 = vmul.f32 %v1132, 1.442695
    %v1161 = vpow.pop %v1160
    %v1162 = vmul.f32 %v1133, 1.442695
    %v1163 = vpow.pop %v1162
    %v1164 = vmul.f32 %v1134, 1.442695
    %v1165 = vpow.pop %v1164
    %v1166 = vmul.f32 %v1135, 1.442695
    %v1167 = vpow.pop %v1166
    %v1168 = vadd.f32 %v1137, 1.0
    %v1169 = vadd.f32 %v1139, 1.0
    %v1170 = vadd.f32 %v1141, 1.0
    %v1171 = vadd.f32 %v1143, 1.0
    %v1172 = vadd.f32 %v1145, 1.0
    %v1173 = vadd.f32 %v1147, 1.0
    %v1174 = vadd.f32 %v1149, 1.0
    %v1175 = vadd.f32 %v1151, 1.0
    %v1176 = vadd.f32 %v1153, 1.0
    %v1177 = vadd.f32 %v1155, 1.0
    %v1178 = vadd.f32 %v1157, 1.0
    %v1179 = vadd.f32 %v1159, 1.0
    %v1180 = vadd.f32 %v1161, 1.0
    %v1181 = vadd.f32 %v1163, 1.0
    %v1182 = vadd.f32 %v1165, 1.0
    %v1183 = vadd.f32 %v1167, 1.0
    %v1184 = vrcp.pop %v1168
    %v1185 = vmul.f32 1.0, %v1184
    %v1186 = vrcp.pop %v1169
    %v1187 = vmul.f32 1.0, %v1186
    %v1188 = vrcp.pop %v1170
    %v1189 = vmul.f32 1.0, %v1188
    %v1190 = vrcp.pop %v1171
    %v1191 = vmul.f32 1.0, %v1190
    %v1192 = vrcp.pop %v1172
    %v1193 = vmul.f32 1.0, %v1192
    %v1194 = vrcp.pop %v1173
    %v1195 = vmul.f32 1.0, %v1194
    %v1196 = vrcp.pop %v1174
    %v1197 = vmul.f32 1.0, %v1196
    %v1198 = vrcp.pop %v1175
    %v1199 = vmul.f32 1.0, %v1198
    %v1200 = vrcp.pop %v1176
    %v1201 = vmul.f32 1.0, %v1200
    %v1202 = vrcp.pop %v1177
    %v1203 = vmul.f32 1.0, %v1202
    %v1204 = vrcp.pop %v1178
    %v1205 = vmul.f32 1.0, %v1204
    %v1206 = vrcp.pop %v1179
    %v1207 = vmul.f32 1.0, %v1206
    %v1208 = vrcp.pop %v1180
    %v1209 = vmul.f32 1.0, %v1208
    %v1210 = vrcp.pop %v1181
    %v1211 = vmul.f32 1.0, %v1210
    %v1212 = vrcp.pop %v1182
    %v1213 = vmul.f32 1.0, %v1212
    %v1214 = vrcp.pop %v1183
    %v1215 = vmul.f32 1.0, %v1214
    %v1216 = vlaneseq
    %v1217 = vshrl.u32 %v1216, 7
    %v1218 = vsub.s32 0, %v1217
    %v1219 = vrot.slane %v987, %v1218
    %v1220 = vlaneseq
    %v1221 = vshrl.u32 %v1220, 7
    %v1222 = vsub.s32 0, %v1221
    %v1223 = vrot.slane %v989, %v1222
    %1225 = vset.pattern.permute.xlu0 0
    %1226 = vperm.xlu0 %1225, %v1185
    %v1227 = vpop.permute.xlu0 %1226
    %1230 = vset.pattern.permute.xlu0 0
    %1231 = vperm.xlu0 %1230, %v1187
    %v1232 = vpop.permute.xlu0 %1231
    %1235 = vset.pattern.permute.xlu0 0
    %1236 = vperm.xlu0 %1235, %v1189
    %v1237 = vpop.permute.xlu0 %1236
    %1240 = vset.pattern.permute.xlu0 0
    %1241 = vperm.xlu0 %1240, %v1191
    %v1242 = vpop.permute.xlu0 %1241
    %1245 = vset.pattern.permute.xlu0 0
    %1246 = vperm.xlu0 %1245, %v1193
    %v1247 = vpop.permute.xlu0 %1246
    %1250 = vset.pattern.permute.xlu0 0
    %1251 = vperm.xlu0 %1250, %v1195
    %v1252 = vpop.permute.xlu0 %1251
    %1255 = vset.pattern.permute.xlu0 0
    %1256 = vperm.xlu0 %1255, %v1197
    %v1257 = vpop.permute.xlu0 %1256
    %1260 = vset.pattern.permute.xlu0 0
    %1261 = vperm.xlu0 %1260, %v1199
    %v1262 = vpop.permute.xlu0 %1261
    %1265 = vset.pattern.permute.xlu0 0
    %1266 = vperm.xlu0 %1265, %v1201
    %v1267 = vpop.permute.xlu0 %1266
    %1270 = vset.pattern.permute.xlu0 0
    %1271 = vperm.xlu0 %1270, %v1203
    %v1272 = vpop.permute.xlu0 %1271
    %1275 = vset.pattern.permute.xlu0 0
    %1276 = vperm.xlu0 %1275, %v1205
    %v1277 = vpop.permute.xlu0 %1276
    %1280 = vset.pattern.permute.xlu0 0
    %1281 = vperm.xlu0 %1280, %v1207
    %v1282 = vpop.permute.xlu0 %1281
    %1285 = vset.pattern.permute.xlu0 0
    %1286 = vperm.xlu0 %1285, %v1209
    %v1287 = vpop.permute.xlu0 %1286
    %1290 = vset.pattern.permute.xlu0 0
    %1291 = vperm.xlu0 %1290, %v1211
    %v1292 = vpop.permute.xlu0 %1291
    %1295 = vset.pattern.permute.xlu0 0
    %1296 = vperm.xlu0 %1295, %v1213
    %v1297 = vpop.permute.xlu0 %1296
    %1300 = vset.pattern.permute.xlu0 0
    %1301 = vperm.xlu0 %1300, %v1215
    %v1302 = vpop.permute.xlu0 %1301
    %v1304 = vmul.f32 %v1219, %v1227
    %v1305 = vmul.f32 %v1219, %v1232
    %v1306 = vmul.f32 %v1219, %v1237
    %v1307 = vmul.f32 %v1219, %v1242
    %v1308 = vmul.f32 %v1219, %v1247
    %v1309 = vmul.f32 %v1219, %v1252
    %v1310 = vmul.f32 %v1219, %v1257
    %v1311 = vmul.f32 %v1219, %v1262
    %v1312 = vmul.f32 %v1223, %v1267
    %v1313 = vmul.f32 %v1223, %v1272
    %v1314 = vmul.f32 %v1223, %v1277
    %v1315 = vmul.f32 %v1223, %v1282
    %v1316 = vmul.f32 %v1223, %v1287
    %v1317 = vmul.f32 %v1223, %v1292
    %v1318 = vmul.f32 %v1223, %v1297
    %v1319 = vmul.f32 %v1223, %v1302
    %v1320 = vmul.f32 %v18, %v1304
    %v1321 = vmul.f32 %v19, %v1305
    %v1322 = vmul.f32 %v20, %v1306
    %v1323 = vmul.f32 %v21, %v1307
    %v1324 = vmul.f32 %v22, %v1308
    %v1325 = vmul.f32 %v23, %v1309
    %v1326 = vmul.f32 %v24, %v1310
    %v1327 = vmul.f32 %v25, %v1311
    %v1328 = vmul.f32 %v26, %v1312
    %v1329 = vmul.f32 %v27, %v1313
    %v1330 = vmul.f32 %v28, %v1314
    %v1331 = vmul.f32 %v29, %v1315
    %v1332 = vmul.f32 %v30, %v1316
    %v1333 = vmul.f32 %v31, %v1317
    %v1334 = vmul.f32 %v32, %v1318
    %v1335 = vmul.f32 %v33, %v1319
    %1336 = vst [vmem:[#allocation2] sm:$0xff] %v1320
    %1337 = vst [vmem:[#allocation2 + $0x8] sm:$0xff] %v1321
    %1338 = vst [vmem:[#allocation2 + $0x10] sm:$0xff] %v1322
    %1339 = vst [vmem:[#allocation2 + $0x18] sm:$0xff] %v1323
    %1340 = vst [vmem:[#allocation2 + $0x20] sm:$0xff] %v1324
    %1341 = vst [vmem:[#allocation2 + $0x28] sm:$0xff] %v1325
    %1342 = vst [vmem:[#allocation2 + $0x30] sm:$0xff] %v1326
    %1343 = vst [vmem:[#allocation2 + $0x38] sm:$0xff] %v1327
    %1344 = vst [vmem:[#allocation2 + $0x40] sm:$0xff] %v1328
    %1345 = vst [vmem:[#allocation2 + $0x48] sm:$0xff] %v1329
    %1346 = vst [vmem:[#allocation2 + $0x50] sm:$0xff] %v1330
    %1347 = vst [vmem:[#allocation2 + $0x58] sm:$0xff] %v1331
    %1348 = vst [vmem:[#allocation2 + $0x60] sm:$0xff] %v1332
    %1349 = vst [vmem:[#allocation2 + $0x68] sm:$0xff] %v1333
    %1350 = vst [vmem:[#allocation2 + $0x70] sm:$0xff] %v1334
    %1351 = vst [vmem:[#allocation2 + $0x78] sm:$0xff] %v1335
    // Predicated region
    $region18: #{biattn_forward.1} parent=1 // pred_check
      _
    $region19: #{biattn_forward.1} parent=1 // pred_check_branch
      %1353 = sbr.rel (0) target = $region21
    $region20: #{biattn_forward.1} parent=1 // pred_region
      %s1355 = ssub.s32 2048, 2048
      %1356 = vsyncadd [#allocation3], %s1355
      %s1357 = sshll.u32 [#allocation2], 4
      %s1358 = int_to_ptr.vmem [resolvable:$true] %s1357
      %1363 = dma.vmem_to_hbm [thread:$0]  %s1358, 2048, %s4, [#allocation3], 128, 128, 8
    $region21: #{biattn_forward.1} parent=1 // pred_fallthru
      _
    // Predicated region
    $region22: #{biattn_forward.1} parent=1 // pred_check
      _
    $region23: #{biattn_forward.1} parent=1 // pred_check_branch
      %1365 = sbr.rel (0) target = $region25
    $region24: #{biattn_forward.1} parent=1 // pred_region
      %1366 = dma.done [#allocation3], 2048
    $region25: #{biattn_forward.1} parent=1 // pred_fallthru
      _
    %1367 = vsyncpa [#allocation3], 1

</llo_original>
